<compile_context>
chip_gen: v6e
topology: v6e:2x2x1
jax: 0.10.0
libtpu: 0.0.40
codegen_flags: <defaults>
</compile_context>

<pallas_src>
import jax
import jax.numpy as jnp
from jax.experimental import pallas as pl
from jax.experimental.pallas import tpu as pltpu

K = 7            # spatial conv kernel size
PAD = (K - 1) // 2


def _round_up(v, m):
    return -(-v // m) * m


def _choose_block_n(N, C, H, W, itemsize, budget_bytes=24 << 20, max_block_n=64):
    """Largest divisor of N whose real (tile-padded) footprint fits the budget."""
    HW = H * W
    hw_pad = _round_up(HW, 128)                       # lane padding
    sub = {4: 8, 2: 16, 1: 32}.get(itemsize, 8)       # sublane padding for x/out dtype
    c_pad = _round_up(C, sub)
    L = HW + 2 * (PAD * W + PAD)                      # flat padded pooled-map length
    l_pad = _round_up(L, 128)

    def footprint(nb):
        io = 4 * nb * c_pad * hw_pad * itemsize            # x + out, double-buffered
        scratch = 2 * _round_up(nb, 8) * l_pad * 4         # padded pooled scratch (f32)
        temps = nb * (c_pad * hw_pad + 8 * hw_pad) * 4     # f32 temporaries (xf, acc, ...)
        return io + scratch + temps

    divisors = [d for d in range(1, N + 1) if N % d == 0]
    fitting = [d for d in divisors if d <= max_block_n and footprint(d) <= budget_bytes]
    if not fitting:
        fitting = [1]
    nb = max(fitting)
    # Prefer a multiple of 8 (full sublane occupancy for the pool / sigmoid / scale).
    mult8 = [d for d in fitting if d % 8 == 0]
    if mult8:
        nb = max(mult8)
    # Prefer >= 2 grid steps (both v7x TensorCores get work, pipeline overlap),
    # but never at the cost of dropping below full sublane occupancy.
    if N // nb < 2:
        smaller = [d for d in fitting if d < nb and (d >= 8 or nb < 8)]
        if smaller:
            nb = max(smaller)
    return nb


def _make_kernel(Nb, C, H, W):
    HW = H * W
    E = PAD * W + PAD          # flat zero pad on each side of the pooled map
    L = HW + 2 * E

    def kernel(x_ref, w_ref, bns_ref, out_ref, pad_ref):
        """x_ref/out_ref: (Nb, C, H*W) blocks (lane-dense last dim).
        w_ref:   (2*K*K,) SMEM conv weights (BN scale pre-folded), (c, ky, kx) order.
        bns_ref: (1,) SMEM folded BatchNorm shift.
        pad_ref: (2, Nb, L) f32 zero-padded flat pooled maps.
        """
        f32 = jnp.float32

        # ---- (1) ChannelPool: whole-block cross-sublane reductions (XLU) ----
        xf = x_ref[...].astype(f32)                 # (Nb, C, HW)
        cmax = jnp.max(xf, axis=1)                  # (Nb, HW)
        cmean = jnp.mean(xf, axis=1)                # (Nb, HW)

        # ---- (2) stage pooled maps in the lane-dense zero-padded buffer -----
        # Re-zero only the two small borders every step (interior rewritten;
        # not gated on program_id because each core has its own scratch under
        # "parallel" semantics).
        border = jnp.zeros((2, Nb, E), f32)
        pad_ref[:, :, 0:E] = border
        pad_ref[:, :, E + HW:L] = border
        pad_ref[0, :, E:E + HW] = cmax
        pad_ref[1, :, E:E + HW] = cmean

        # ---- (3) static column masks for the horizontal border (hoisted) ----
        col = jax.lax.broadcasted_iota(jnp.int32, (1, HW), 1) % W
        col_masks = []
        for kx in range(K):
            if kx == PAD:
                col_masks.append(None)              # all columns valid: skip the mul
            else:
                m = ((col >= (PAD - kx)) & (col < (W + PAD - kx))).astype(f32)
                col_masks.append(m)

        # ---- (4) 7x7 "same" conv: 98 lane-dense static-offset loads + FMAs --
        # tap value for output o = oy*W+ox is pad[c, o + ky*W + kx] (vertical
        # out-of-bounds falls into the zero pad, horizontal wrap is masked).
        acc = jnp.zeros((Nb, HW), f32)
        for c in range(2):
            for ky in range(K):
                base = ky * W
                for kx in range(K):
                    wv = w_ref[c * K * K + ky * K + kx]          # SMEM scalar
                    slab = pad_ref[c, :, base + kx:base + kx + HW]
                    tap = slab * wv
                    if col_masks[kx] is not None:
                        tap = tap * col_masks[kx]
                    acc = acc + tap

        # ---- (5) folded BN shift (scale already in the weights) + sigmoid ---
        scale = jax.nn.sigmoid(acc + bns_ref[0])                 # (Nb, HW)

        # ---- (6) out = x * scale: one dense full-block store ----------------
        out_ref[...] = (x_ref[...].astype(f32) * scale[:, None, :]
                        ).astype(out_ref.dtype)

    return kernel


def spatial_attention(x, conv_w, bn_gamma, bn_beta, bn_mean, bn_var,
                      eps=1e-5, block_n=None):
    """x: (N, C, H, W).  conv_w: (1, 2, 7, 7) OIHW.  BN params: shape (1,)."""
    N, C, H, W = x.shape
    HW = H * W
    E = PAD * W + PAD
    L = HW + 2 * E

    # Fold eval-mode BatchNorm2d(1): scale goes into the weights, keep shift.
    bn_scale = bn_gamma.astype(jnp.float32) / jnp.sqrt(
        bn_var.astype(jnp.float32) + eps)                       # (1,)
    bn_shift = (bn_beta.astype(jnp.float32)
                - bn_mean.astype(jnp.float32) * bn_scale)       # (1,)
    w_folded = (conv_w.astype(jnp.float32) * bn_scale[0]).reshape(-1)  # (2*K*K,)

    itemsize = jnp.dtype(x.dtype).itemsize
    if block_n is None:
        block_n = _choose_block_n(N, C, H, W, itemsize)
    Nb = int(block_n)
    assert N % Nb == 0, "block_n must divide the batch size"

    # Lane-dense last dimension (free reshape of contiguous trailing dims).
    x_flat = x.reshape(N, C, HW)

    kernel = _make_kernel(Nb, C, H, W)

    out_flat = pl.pallas_call(
        kernel,
        out_shape=jax.ShapeDtypeStruct((N, C, HW), x.dtype),
        grid=(N // Nb,),
        in_specs=[
            pl.BlockSpec((Nb, C, HW), lambda n: (n, 0, 0)),
            pl.BlockSpec(memory_space=pltpu.MemorySpace.SMEM),
            pl.BlockSpec(memory_space=pltpu.MemorySpace.SMEM),
        ],
        out_specs=pl.BlockSpec((Nb, C, HW), lambda n: (n, 0, 0)),
        scratch_shapes=[
            pltpu.VMEM((2, Nb, L), jnp.float32),   # zero-padded flat pooled maps
        ],
        compiler_params=pltpu.CompilerParams(
            dimension_semantics=("parallel",),
            # Block sizing budgets ~24 MiB of padded, double-buffered data, so
            # 48 MiB is safe on v7x (64 MiB physical) as well as v5e/v6e.
            vmem_limit_bytes=48 * 1024 * 1024),
    )(x_flat, w_folded, bn_shift)

    return out_flat.reshape(N, C, H, W)


def spatial_attention_ref(x, conv_w, bn_gamma, bn_beta, bn_mean, bn_var, eps=1e-5):
    """Pure-JAX reference (mirrors the PyTorch forward, BN in eval mode)."""
    cmax = jnp.max(x, axis=1, keepdims=True)
    cmean = jnp.mean(x, axis=1, keepdims=True)
    xc = jnp.concatenate([cmax, cmean], axis=1)                  # (N, 2, H, W)
    conv = jax.lax.conv_general_dilated(
        xc, conv_w, window_strides=(1, 1), padding=[(PAD, PAD), (PAD, PAD)],
        dimension_numbers=("NCHW", "OIHW", "NCHW"))
    bn = (conv - bn_mean[None, :, None, None]) / jnp.sqrt(
        bn_var[None, :, None, None] + eps) * bn_gamma[None, :, None, None] \
        + bn_beta[None, :, None, None]
    scale = jax.nn.sigmoid(bn)
    return x * scale


if __name__ == "__main__":
    key = jax.random.PRNGKey(0)
    k_x, k_w, k_x2, k_w2 = jax.random.split(key, 4)

    # Deterministic parameter init (synthetic; no checkpoint).
    bn_gamma = jnp.array([1.2], dtype=jnp.float32)
    bn_beta = jnp.array([0.1], dtype=jnp.float32)
    bn_mean = jnp.array([0.05], dtype=jnp.float32)   # eval-mode running stats
    bn_var = jnp.array([0.9], dtype=jnp.float32)
    # TODO(synk): PyTorch BatchNorm in .train() would use batch statistics; this
    # kernel implements the standard eval-mode (folded) BatchNorm.

    # --- primary test ---
    N, C, H, W = 2, 4, 16, 16
    x = jax.random.normal(k_x, (N, C, H, W), dtype=jnp.float32)
    conv_w = jax.random.normal(k_w, (1, 2, K, K), dtype=jnp.float32) * 0.1

    out = jax.block_until_ready(
        spatial_attention(x, conv_w, bn_gamma, bn_beta, bn_mean, bn_var))
    ref = spatial_attention_ref(x, conv_w, bn_gamma, bn_beta, bn_mean, bn_var)
    assert out.shape == (N, C, H, W)
    assert jnp.allclose(out, ref, atol=1e-5, rtol=1e-5), (
        f"max abs diff = {jnp.max(jnp.abs(out - ref))}")

    # --- secondary test: different C and a batched (block_n > 1) path ---
    N2, C2 = 4, 3
    x2 = jax.random.normal(k_x2, (N2, C2, H, W), dtype=jnp.float32)
    conv_w2 = jax.random.normal(k_w2, (1, 2, K, K), dtype=jnp.float32) * 0.1
    out2 = jax.block_until_ready(
        spatial_attention(x2, conv_w2, bn_gamma, bn_beta, bn_mean, bn_var))
    ref2 = spatial_attention_ref(x2, conv_w2, bn_gamma, bn_beta, bn_mean, bn_var)
    assert jnp.allclose(out2, ref2, atol=1e-5, rtol=1e-5), (
        f"max abs diff = {jnp.max(jnp.abs(out2 - ref2))}")

    print("KERNEL_OK")
</pallas_src>

<mosaic_0001>
module attributes {stable_mosaic.version = 11 : i64} {
  func.func @kernel(%arg0: i32, %arg1: memref<1x4x256xf32, #tpu.memory_space<vmem>>, %arg2: memref<98xf32, #tpu.memory_space<smem>>, %arg3: memref<1xf32, #tpu.memory_space<smem>>, %arg4: memref<1x4x256xf32, #tpu.memory_space<vmem>>, %arg5: memref<2x1x358xf32, #tpu.memory_space<vmem>>) attributes {dimension_semantics = [#tpu.dimension_semantics<parallel>], iteration_bounds = array<i64: 2>, scalar_prefetch = 0 : i64, scratch_operands = 1 : i64, tpu.core_type = #tpu.core_type<tc>, window_params = [{transform_indices = @transform_0, window_bounds = array<i64: 1, 4, 256>}, {transform_indices = @transform_1, window_bounds = array<i64: 98>}, {transform_indices = @transform_2, window_bounds = array<i64: 1>}, {transform_indices = @transform_3, window_bounds = array<i64: 1, 4, 256>}]} {
    %c0 = arith.constant 0 : index
    %c0_0 = arith.constant 0 : index
    %c0_1 = arith.constant 0 : index
    %0 = vector.load %arg1[%c0, %c0_0, %c0_1] : memref<1x4x256xf32, #tpu.memory_space<vmem>>, vector<1x4x256xf32>
    %cst = arith.constant dense<0xFF800000> : vector<1x256xf32>
    %1 = vector.multi_reduction <maximumf>, %0, %cst [1] : vector<1x4x256xf32> to vector<1x256xf32>
    %cst_2 = arith.constant dense<0.000000e+00> : vector<1x256xf32>
    %2 = vector.multi_reduction <add>, %0, %cst_2 [1] : vector<1x4x256xf32> to vector<1x256xf32>
    %cst_3 = arith.constant 4.000000e+00 : f32
    %3 = vector.broadcast %cst_3 : f32 to vector<1x256xf32>
    %4 = arith.divf %2, %3 : vector<1x256xf32>
    %cst_4 = arith.constant 0.000000e+00 : f32
    %5 = vector.broadcast %cst_4 : f32 to vector<2x1x51xf32>
    %c0_5 = arith.constant 0 : index
    %c0_6 = arith.constant 0 : index
    %c0_7 = arith.constant 0 : index
    %6 = vector.load %arg5[%c0_5, %c0_6, %c0_7] : memref<2x1x358xf32, #tpu.memory_space<vmem>>, vector<2x1x51xf32>
    tpu.vector_store %arg5[%c0_5, %c0_6, %c0_7], %5 {strides = array<i32>} : memref<2x1x358xf32, #tpu.memory_space<vmem>>, vector<2x1x51xf32>,
    %c0_8 = arith.constant 0 : index
    %c0_9 = arith.constant 0 : index
    %c307 = arith.constant 307 : index
    %7 = vector.load %arg5[%c0_8, %c0_9, %c307] : memref<2x1x358xf32, #tpu.memory_space<vmem>>, vector<2x1x51xf32>
    tpu.vector_store %arg5[%c0_8, %c0_9, %c307], %5 {strides = array<i32>} : memref<2x1x358xf32, #tpu.memory_space<vmem>>, vector<2x1x51xf32>,
    %c0_10 = arith.constant 0 : index
    %c0_11 = arith.constant 0 : index
    %c51 = arith.constant 51 : index
    %8 = vector.load %arg5[%c0_10, %c0_11, %c51] : memref<2x1x358xf32, #tpu.memory_space<vmem>>, vector<1x1x256xf32>
    %9 = vector.shape_cast %8 : vector<1x1x256xf32> to vector<1x256xf32>
    %10 = vector.shape_cast %1 : vector<1x256xf32> to vector<1x1x256xf32>
    tpu.vector_store %arg5[%c0_10, %c0_11, %c51], %10 {strides = array<i32>} : memref<2x1x358xf32, #tpu.memory_space<vmem>>, vector<1x1x256xf32>,
    %c1 = arith.constant 1 : index
    %c0_12 = arith.constant 0 : index
    %c51_13 = arith.constant 51 : index
    %11 = vector.load %arg5[%c1, %c0_12, %c51_13] : memref<2x1x358xf32, #tpu.memory_space<vmem>>, vector<1x1x256xf32>
    %12 = vector.shape_cast %11 : vector<1x1x256xf32> to vector<1x256xf32>
    %13 = vector.shape_cast %4 : vector<1x256xf32> to vector<1x1x256xf32>
    tpu.vector_store %arg5[%c1, %c0_12, %c51_13], %13 {strides = array<i32>} : memref<2x1x358xf32, #tpu.memory_space<vmem>>, vector<1x1x256xf32>,
    %14 = tpu.iota {dimensions = array<i32: 1>} : vector<1x256xi32>
    %c16_i32 = arith.constant 16 : i32
    %c0_i32 = arith.constant 0 : i32
    %15 = arith.cmpi eq, %c16_i32, %c0_i32 : i32
    %c1_i32 = arith.constant 1 : i32
    %16 = arith.select %15, %c1_i32, %c16_i32 : i32
    %17 = vector.broadcast %16 : i32 to vector<1x256xi32>
    %18 = arith.remsi %14, %17 : vector<1x256xi32>
    %c0_i32_14 = arith.constant 0 : i32
    %19 = vector.broadcast %c0_i32_14 : i32 to vector<1x256xi32>
    %20 = arith.cmpi ne, %18, %19 : vector<1x256xi32>
    %c0_i32_15 = arith.constant 0 : i32
    %21 = vector.broadcast %c0_i32_15 : i32 to vector<1x256xi32>
    %22 = arith.cmpi slt, %18, %21 : vector<1x256xi32>
    %c0_i32_16 = arith.constant 0 : i32
    %23 = arith.cmpi slt, %16, %c0_i32_16 : i32
    %24 = vector.broadcast %23 : i1 to vector<1x256xi1>
    %25 = vector.broadcast %24 : vector<1x256xi1> to vector<1x256xi1>
    %26 = arith.xori %22, %25 : vector<1x256xi1>
    %27 = arith.andi %26, %20 : vector<1x256xi1>
    %28 = vector.broadcast %16 : i32 to vector<1x256xi32>
    %29 = arith.addi %18, %28 : vector<1x256xi32>
    %30 = arith.select %27, %29, %18 : vector<1x256xi1>, vector<1x256xi32>
    %c3_i32 = arith.constant 3 : i32
    %31 = vector.broadcast %c3_i32 : i32 to vector<1x256xi32>
    %32 = arith.cmpi sge, %30, %31 : vector<1x256xi32>
    %c19_i32 = arith.constant 19 : i32
    %33 = vector.broadcast %c19_i32 : i32 to vector<1x256xi32>
    %34 = arith.cmpi slt, %30, %33 : vector<1x256xi32>
    %35 = arith.andi %32, %34 : vector<1x256xi1>
    %36 = arith.extui %35 : vector<1x256xi1> to vector<1x256xi32>
    %37 = arith.sitofp %36 : vector<1x256xi32> to vector<1x256xf32>
    %c2_i32 = arith.constant 2 : i32
    %38 = vector.broadcast %c2_i32 : i32 to vector<1x256xi32>
    %39 = arith.cmpi sge, %30, %38 : vector<1x256xi32>
    %c18_i32 = arith.constant 18 : i32
    %40 = vector.broadcast %c18_i32 : i32 to vector<1x256xi32>
    %41 = arith.cmpi slt, %30, %40 : vector<1x256xi32>
    %42 = arith.andi %39, %41 : vector<1x256xi1>
    %43 = arith.extui %42 : vector<1x256xi1> to vector<1x256xi32>
    %44 = arith.sitofp %43 : vector<1x256xi32> to vector<1x256xf32>
    %c1_i32_17 = arith.constant 1 : i32
    %45 = vector.broadcast %c1_i32_17 : i32 to vector<1x256xi32>
    %46 = arith.cmpi sge, %30, %45 : vector<1x256xi32>
    %c17_i32 = arith.constant 17 : i32
    %47 = vector.broadcast %c17_i32 : i32 to vector<1x256xi32>
    %48 = arith.cmpi slt, %30, %47 : vector<1x256xi32>
    %49 = arith.andi %46, %48 : vector<1x256xi1>
    %50 = arith.extui %49 : vector<1x256xi1> to vector<1x256xi32>
    %51 = arith.sitofp %50 : vector<1x256xi32> to vector<1x256xf32>
    %c-1_i32 = arith.constant -1 : i32
    %52 = vector.broadcast %c-1_i32 : i32 to vector<1x256xi32>
    %53 = arith.cmpi sge, %30, %52 : vector<1x256xi32>
    %c15_i32 = arith.constant 15 : i32
    %54 = vector.broadcast %c15_i32 : i32 to vector<1x256xi32>
    %55 = arith.cmpi slt, %30, %54 : vector<1x256xi32>
    %56 = arith.andi %53, %55 : vector<1x256xi1>
    %57 = arith.extui %56 : vector<1x256xi1> to vector<1x256xi32>
    %58 = arith.sitofp %57 : vector<1x256xi32> to vector<1x256xf32>
    %c-2_i32 = arith.constant -2 : i32
    %59 = vector.broadcast %c-2_i32 : i32 to vector<1x256xi32>
    %60 = arith.cmpi sge, %30, %59 : vector<1x256xi32>
    %c14_i32 = arith.constant 14 : i32
    %61 = vector.broadcast %c14_i32 : i32 to vector<1x256xi32>
    %62 = arith.cmpi slt, %30, %61 : vector<1x256xi32>
    %63 = arith.andi %60, %62 : vector<1x256xi1>
    %64 = arith.extui %63 : vector<1x256xi1> to vector<1x256xi32>
    %65 = arith.sitofp %64 : vector<1x256xi32> to vector<1x256xf32>
    %c-3_i32 = arith.constant -3 : i32
    %66 = vector.broadcast %c-3_i32 : i32 to vector<1x256xi32>
    %67 = arith.cmpi sge, %30, %66 : vector<1x256xi32>
    %c13_i32 = arith.constant 13 : i32
    %68 = vector.broadcast %c13_i32 : i32 to vector<1x256xi32>
    %69 = arith.cmpi slt, %30, %68 : vector<1x256xi32>
    %70 = arith.andi %67, %69 : vector<1x256xi1>
    %71 = arith.extui %70 : vector<1x256xi1> to vector<1x256xi32>
    %72 = arith.sitofp %71 : vector<1x256xi32> to vector<1x256xf32>
    %cst_18 = arith.constant 0.000000e+00 : f32
    %73 = vector.broadcast %cst_18 : f32 to vector<1x256xf32>
    %c0_19 = arith.constant 0 : index
    %74 = memref.load %arg2[%c0_19] : memref<98xf32, #tpu.memory_space<smem>>
    %c0_20 = arith.constant 0 : index
    %c0_21 = arith.constant 0 : index
    %c0_22 = arith.constant 0 : index
    %75 = vector.load %arg5[%c0_20, %c0_21, %c0_22] : memref<2x1x358xf32, #tpu.memory_space<vmem>>, vector<1x1x256xf32>
    %76 = vector.shape_cast %75 : vector<1x1x256xf32> to vector<1x256xf32>
    %77 = vector.broadcast %74 : f32 to vector<1x256xf32>
    %78 = arith.mulf %76, %77 : vector<1x256xf32>
    %79 = arith.mulf %78, %37 : vector<1x256xf32>
    %80 = arith.addf %73, %79 : vector<1x256xf32>
    %c1_23 = arith.constant 1 : index
    %81 = memref.load %arg2[%c1_23] : memref<98xf32, #tpu.memory_space<smem>>
    %c0_24 = arith.constant 0 : index
    %c0_25 = arith.constant 0 : index
    %c1_26 = arith.constant 1 : index
    %82 = vector.load %arg5[%c0_24, %c0_25, %c1_26] : memref<2x1x358xf32, #tpu.memory_space<vmem>>, vector<1x1x256xf32>
    %83 = vector.shape_cast %82 : vector<1x1x256xf32> to vector<1x256xf32>
    %84 = vector.broadcast %81 : f32 to vector<1x256xf32>
    %85 = arith.mulf %83, %84 : vector<1x256xf32>
    %86 = arith.mulf %85, %44 : vector<1x256xf32>
    %87 = arith.addf %80, %86 : vector<1x256xf32>
    %c2 = arith.constant 2 : index
    %88 = memref.load %arg2[%c2] : memref<98xf32, #tpu.memory_space<smem>>
    %c0_27 = arith.constant 0 : index
    %c0_28 = arith.constant 0 : index
    %c2_29 = arith.constant 2 : index
    %89 = vector.load %arg5[%c0_27, %c0_28, %c2_29] : memref<2x1x358xf32, #tpu.memory_space<vmem>>, vector<1x1x256xf32>
    %90 = vector.shape_cast %89 : vector<1x1x256xf32> to vector<1x256xf32>
    %91 = vector.broadcast %88 : f32 to vector<1x256xf32>
    %92 = arith.mulf %90, %91 : vector<1x256xf32>
    %93 = arith.mulf %92, %51 : vector<1x256xf32>
    %94 = arith.addf %87, %93 : vector<1x256xf32>
    %c3 = arith.constant 3 : index
    %95 = memref.load %arg2[%c3] : memref<98xf32, #tpu.memory_space<smem>>
    %c0_30 = arith.constant 0 : index
    %c0_31 = arith.constant 0 : index
    %c3_32 = arith.constant 3 : index
    %96 = vector.load %arg5[%c0_30, %c0_31, %c3_32] : memref<2x1x358xf32, #tpu.memory_space<vmem>>, vector<1x1x256xf32>
    %97 = vector.shape_cast %96 : vector<1x1x256xf32> to vector<1x256xf32>
    %98 = vector.broadcast %95 : f32 to vector<1x256xf32>
    %99 = arith.mulf %97, %98 : vector<1x256xf32>
    %100 = arith.addf %94, %99 : vector<1x256xf32>
    %c4 = arith.constant 4 : index
    %101 = memref.load %arg2[%c4] : memref<98xf32, #tpu.memory_space<smem>>
    %c0_33 = arith.constant 0 : index
    %c0_34 = arith.constant 0 : index
    %c4_35 = arith.constant 4 : index
    %102 = vector.load %arg5[%c0_33, %c0_34, %c4_35] : memref<2x1x358xf32, #tpu.memory_space<vmem>>, vector<1x1x256xf32>
    %103 = vector.shape_cast %102 : vector<1x1x256xf32> to vector<1x256xf32>
    %104 = vector.broadcast %101 : f32 to vector<1x256xf32>
    %105 = arith.mulf %103, %104 : vector<1x256xf32>
    %106 = arith.mulf %105, %58 : vector<1x256xf32>
    %107 = arith.addf %100, %106 : vector<1x256xf32>
    %c5 = arith.constant 5 : index
    %108 = memref.load %arg2[%c5] : memref<98xf32, #tpu.memory_space<smem>>
    %c0_36 = arith.constant 0 : index
    %c0_37 = arith.constant 0 : index
    %c5_38 = arith.constant 5 : index
    %109 = vector.load %arg5[%c0_36, %c0_37, %c5_38] : memref<2x1x358xf32, #tpu.memory_space<vmem>>, vector<1x1x256xf32>
    %110 = vector.shape_cast %109 : vector<1x1x256xf32> to vector<1x256xf32>
    %111 = vector.broadcast %108 : f32 to vector<1x256xf32>
    %112 = arith.mulf %110, %111 : vector<1x256xf32>
    %113 = arith.mulf %112, %65 : vector<1x256xf32>
    %114 = arith.addf %107, %113 : vector<1x256xf32>
    %c6 = arith.constant 6 : index
    %115 = memref.load %arg2[%c6] : memref<98xf32, #tpu.memory_space<smem>>
    %c0_39 = arith.constant 0 : index
    %c0_40 = arith.constant 0 : index
    %c6_41 = arith.constant 6 : index
    %116 = vector.load %arg5[%c0_39, %c0_40, %c6_41] : memref<2x1x358xf32, #tpu.memory_space<vmem>>, vector<1x1x256xf32>
    %117 = vector.shape_cast %116 : vector<1x1x256xf32> to vector<1x256xf32>
    %118 = vector.broadcast %115 : f32 to vector<1x256xf32>
    %119 = arith.mulf %117, %118 : vector<1x256xf32>
    %120 = arith.mulf %119, %72 : vector<1x256xf32>
    %121 = arith.addf %114, %120 : vector<1x256xf32>
    %c7 = arith.constant 7 : index
    %122 = memref.load %arg2[%c7] : memref<98xf32, #tpu.memory_space<smem>>
    %c0_42 = arith.constant 0 : index
    %c0_43 = arith.constant 0 : index
    %c16 = arith.constant 16 : index
    %123 = vector.load %arg5[%c0_42, %c0_43, %c16] : memref<2x1x358xf32, #tpu.memory_space<vmem>>, vector<1x1x256xf32>
    %124 = vector.shape_cast %123 : vector<1x1x256xf32> to vector<1x256xf32>
    %125 = vector.broadcast %122 : f32 to vector<1x256xf32>
    %126 = arith.mulf %124, %125 : vector<1x256xf32>
    %127 = arith.mulf %126, %37 : vector<1x256xf32>
    %128 = arith.addf %121, %127 : vector<1x256xf32>
    %c8 = arith.constant 8 : index
    %129 = memref.load %arg2[%c8] : memref<98xf32, #tpu.memory_space<smem>>
    %c0_44 = arith.constant 0 : index
    %c0_45 = arith.constant 0 : index
    %c17 = arith.constant 17 : index
    %130 = vector.load %arg5[%c0_44, %c0_45, %c17] : memref<2x1x358xf32, #tpu.memory_space<vmem>>, vector<1x1x256xf32>
    %131 = vector.shape_cast %130 : vector<1x1x256xf32> to vector<1x256xf32>
    %132 = vector.broadcast %129 : f32 to vector<1x256xf32>
    %133 = arith.mulf %131, %132 : vector<1x256xf32>
    %134 = arith.mulf %133, %44 : vector<1x256xf32>
    %135 = arith.addf %128, %134 : vector<1x256xf32>
    %c9 = arith.constant 9 : index
    %136 = memref.load %arg2[%c9] : memref<98xf32, #tpu.memory_space<smem>>
    %c0_46 = arith.constant 0 : index
    %c0_47 = arith.constant 0 : index
    %c18 = arith.constant 18 : index
    %137 = vector.load %arg5[%c0_46, %c0_47, %c18] : memref<2x1x358xf32, #tpu.memory_space<vmem>>, vector<1x1x256xf32>
    %138 = vector.shape_cast %137 : vector<1x1x256xf32> to vector<1x256xf32>
    %139 = vector.broadcast %136 : f32 to vector<1x256xf32>
    %140 = arith.mulf %138, %139 : vector<1x256xf32>
    %141 = arith.mulf %140, %51 : vector<1x256xf32>
    %142 = arith.addf %135, %141 : vector<1x256xf32>
    %c10 = arith.constant 10 : index
    %143 = memref.load %arg2[%c10] : memref<98xf32, #tpu.memory_space<smem>>
    %c0_48 = arith.constant 0 : index
    %c0_49 = arith.constant 0 : index
    %c19 = arith.constant 19 : index
    %144 = vector.load %arg5[%c0_48, %c0_49, %c19] : memref<2x1x358xf32, #tpu.memory_space<vmem>>, vector<1x1x256xf32>
    %145 = vector.shape_cast %144 : vector<1x1x256xf32> to vector<1x256xf32>
    %146 = vector.broadcast %143 : f32 to vector<1x256xf32>
    %147 = arith.mulf %145, %146 : vector<1x256xf32>
    %148 = arith.addf %142, %147 : vector<1x256xf32>
    %c11 = arith.constant 11 : index
    %149 = memref.load %arg2[%c11] : memref<98xf32, #tpu.memory_space<smem>>
    %c0_50 = arith.constant 0 : index
    %c0_51 = arith.constant 0 : index
    %c20 = arith.constant 20 : index
    %150 = vector.load %arg5[%c0_50, %c0_51, %c20] : memref<2x1x358xf32, #tpu.memory_space<vmem>>, vector<1x1x256xf32>
    %151 = vector.shape_cast %150 : vector<1x1x256xf32> to vector<1x256xf32>
    %152 = vector.broadcast %149 : f32 to vector<1x256xf32>
    %153 = arith.mulf %151, %152 : vector<1x256xf32>
    %154 = arith.mulf %153, %58 : vector<1x256xf32>
    %155 = arith.addf %148, %154 : vector<1x256xf32>
    %c12 = arith.constant 12 : index
    %156 = memref.load %arg2[%c12] : memref<98xf32, #tpu.memory_space<smem>>
    %c0_52 = arith.constant 0 : index
    %c0_53 = arith.constant 0 : index
    %c21 = arith.constant 21 : index
    %157 = vector.load %arg5[%c0_52, %c0_53, %c21] : memref<2x1x358xf32, #tpu.memory_space<vmem>>, vector<1x1x256xf32>
    %158 = vector.shape_cast %157 : vector<1x1x256xf32> to vector<1x256xf32>
    %159 = vector.broadcast %156 : f32 to vector<1x256xf32>
    %160 = arith.mulf %158, %159 : vector<1x256xf32>
    %161 = arith.mulf %160, %65 : vector<1x256xf32>
    %162 = arith.addf %155, %161 : vector<1x256xf32>
    %c13 = arith.constant 13 : index
    %163 = memref.load %arg2[%c13] : memref<98xf32, #tpu.memory_space<smem>>
    %c0_54 = arith.constant 0 : index
    %c0_55 = arith.constant 0 : index
    %c22 = arith.constant 22 : index
    %164 = vector.load %arg5[%c0_54, %c0_55, %c22] : memref<2x1x358xf32, #tpu.memory_space<vmem>>, vector<1x1x256xf32>
    %165 = vector.shape_cast %164 : vector<1x1x256xf32> to vector<1x256xf32>
    %166 = vector.broadcast %163 : f32 to vector<1x256xf32>
    %167 = arith.mulf %165, %166 : vector<1x256xf32>
    %168 = arith.mulf %167, %72 : vector<1x256xf32>
    %169 = arith.addf %162, %168 : vector<1x256xf32>
    %c14 = arith.constant 14 : index
    %170 = memref.load %arg2[%c14] : memref<98xf32, #tpu.memory_space<smem>>
    %c0_56 = arith.constant 0 : index
    %c0_57 = arith.constant 0 : index
    %c32 = arith.constant 32 : index
    %171 = vector.load %arg5[%c0_56, %c0_57, %c32] : memref<2x1x358xf32, #tpu.memory_space<vmem>>, vector<1x1x256xf32>
    %172 = vector.shape_cast %171 : vector<1x1x256xf32> to vector<1x256xf32>
    %173 = vector.broadcast %170 : f32 to vector<1x256xf32>
    %174 = arith.mulf %172, %173 : vector<1x256xf32>
    %175 = arith.mulf %174, %37 : vector<1x256xf32>
    %176 = arith.addf %169, %175 : vector<1x256xf32>
    %c15 = arith.constant 15 : index
    %177 = memref.load %arg2[%c15] : memref<98xf32, #tpu.memory_space<smem>>
    %c0_58 = arith.constant 0 : index
    %c0_59 = arith.constant 0 : index
    %c33 = arith.constant 33 : index
    %178 = vector.load %arg5[%c0_58, %c0_59, %c33] : memref<2x1x358xf32, #tpu.memory_space<vmem>>, vector<1x1x256xf32>
    %179 = vector.shape_cast %178 : vector<1x1x256xf32> to vector<1x256xf32>
    %180 = vector.broadcast %177 : f32 to vector<1x256xf32>
    %181 = arith.mulf %179, %180 : vector<1x256xf32>
    %182 = arith.mulf %181, %44 : vector<1x256xf32>
    %183 = arith.addf %176, %182 : vector<1x256xf32>
    %c16_60 = arith.constant 16 : index
    %184 = memref.load %arg2[%c16_60] : memref<98xf32, #tpu.memory_space<smem>>
    %c0_61 = arith.constant 0 : index
    %c0_62 = arith.constant 0 : index
    %c34 = arith.constant 34 : index
    %185 = vector.load %arg5[%c0_61, %c0_62, %c34] : memref<2x1x358xf32, #tpu.memory_space<vmem>>, vector<1x1x256xf32>
    %186 = vector.shape_cast %185 : vector<1x1x256xf32> to vector<1x256xf32>
    %187 = vector.broadcast %184 : f32 to vector<1x256xf32>
    %188 = arith.mulf %186, %187 : vector<1x256xf32>
    %189 = arith.mulf %188, %51 : vector<1x256xf32>
    %190 = arith.addf %183, %189 : vector<1x256xf32>
    %c17_63 = arith.constant 17 : index
    %191 = memref.load %arg2[%c17_63] : memref<98xf32, #tpu.memory_space<smem>>
    %c0_64 = arith.constant 0 : index
    %c0_65 = arith.constant 0 : index
    %c35 = arith.constant 35 : index
    %192 = vector.load %arg5[%c0_64, %c0_65, %c35] : memref<2x1x358xf32, #tpu.memory_space<vmem>>, vector<1x1x256xf32>
    %193 = vector.shape_cast %192 : vector<1x1x256xf32> to vector<1x256xf32>
    %194 = vector.broadcast %191 : f32 to vector<1x256xf32>
    %195 = arith.mulf %193, %194 : vector<1x256xf32>
    %196 = arith.addf %190, %195 : vector<1x256xf32>
    %c18_66 = arith.constant 18 : index
    %197 = memref.load %arg2[%c18_66] : memref<98xf32, #tpu.memory_space<smem>>
    %c0_67 = arith.constant 0 : index
    %c0_68 = arith.constant 0 : index
    %c36 = arith.constant 36 : index
    %198 = vector.load %arg5[%c0_67, %c0_68, %c36] : memref<2x1x358xf32, #tpu.memory_space<vmem>>, vector<1x1x256xf32>
    %199 = vector.shape_cast %198 : vector<1x1x256xf32> to vector<1x256xf32>
    %200 = vector.broadcast %197 : f32 to vector<1x256xf32>
    %201 = arith.mulf %199, %200 : vector<1x256xf32>
    %202 = arith.mulf %201, %58 : vector<1x256xf32>
    %203 = arith.addf %196, %202 : vector<1x256xf32>
    %c19_69 = arith.constant 19 : index
    %204 = memref.load %arg2[%c19_69] : memref<98xf32, #tpu.memory_space<smem>>
    %c0_70 = arith.constant 0 : index
    %c0_71 = arith.constant 0 : index
    %c37 = arith.constant 37 : index
    %205 = vector.load %arg5[%c0_70, %c0_71, %c37] : memref<2x1x358xf32, #tpu.memory_space<vmem>>, vector<1x1x256xf32>
    %206 = vector.shape_cast %205 : vector<1x1x256xf32> to vector<1x256xf32>
    %207 = vector.broadcast %204 : f32 to vector<1x256xf32>
    %208 = arith.mulf %206, %207 : vector<1x256xf32>
    %209 = arith.mulf %208, %65 : vector<1x256xf32>
    %210 = arith.addf %203, %209 : vector<1x256xf32>
    %c20_72 = arith.constant 20 : index
    %211 = memref.load %arg2[%c20_72] : memref<98xf32, #tpu.memory_space<smem>>
    %c0_73 = arith.constant 0 : index
    %c0_74 = arith.constant 0 : index
    %c38 = arith.constant 38 : index
    %212 = vector.load %arg5[%c0_73, %c0_74, %c38] : memref<2x1x358xf32, #tpu.memory_space<vmem>>, vector<1x1x256xf32>
    %213 = vector.shape_cast %212 : vector<1x1x256xf32> to vector<1x256xf32>
    %214 = vector.broadcast %211 : f32 to vector<1x256xf32>
    %215 = arith.mulf %213, %214 : vector<1x256xf32>
    %216 = arith.mulf %215, %72 : vector<1x256xf32>
    %217 = arith.addf %210, %216 : vector<1x256xf32>
    %c21_75 = arith.constant 21 : index
    %218 = memref.load %arg2[%c21_75] : memref<98xf32, #tpu.memory_space<smem>>
    %c0_76 = arith.constant 0 : index
    %c0_77 = arith.constant 0 : index
    %c48 = arith.constant 48 : index
    %219 = vector.load %arg5[%c0_76, %c0_77, %c48] : memref<2x1x358xf32, #tpu.memory_space<vmem>>, vector<1x1x256xf32>
    %220 = vector.shape_cast %219 : vector<1x1x256xf32> to vector<1x256xf32>
    %221 = vector.broadcast %218 : f32 to vector<1x256xf32>
    %222 = arith.mulf %220, %221 : vector<1x256xf32>
    %223 = arith.mulf %222, %37 : vector<1x256xf32>
    %224 = arith.addf %217, %223 : vector<1x256xf32>
    %c22_78 = arith.constant 22 : index
    %225 = memref.load %arg2[%c22_78] : memref<98xf32, #tpu.memory_space<smem>>
    %c0_79 = arith.constant 0 : index
    %c0_80 = arith.constant 0 : index
    %c49 = arith.constant 49 : index
    %226 = vector.load %arg5[%c0_79, %c0_80, %c49] : memref<2x1x358xf32, #tpu.memory_space<vmem>>, vector<1x1x256xf32>
    %227 = vector.shape_cast %226 : vector<1x1x256xf32> to vector<1x256xf32>
    %228 = vector.broadcast %225 : f32 to vector<1x256xf32>
    %229 = arith.mulf %227, %228 : vector<1x256xf32>
    %230 = arith.mulf %229, %44 : vector<1x256xf32>
    %231 = arith.addf %224, %230 : vector<1x256xf32>
    %c23 = arith.constant 23 : index
    %232 = memref.load %arg2[%c23] : memref<98xf32, #tpu.memory_space<smem>>
    %c0_81 = arith.constant 0 : index
    %c0_82 = arith.constant 0 : index
    %c50 = arith.constant 50 : index
    %233 = vector.load %arg5[%c0_81, %c0_82, %c50] : memref<2x1x358xf32, #tpu.memory_space<vmem>>, vector<1x1x256xf32>
    %234 = vector.shape_cast %233 : vector<1x1x256xf32> to vector<1x256xf32>
    %235 = vector.broadcast %232 : f32 to vector<1x256xf32>
    %236 = arith.mulf %234, %235 : vector<1x256xf32>
    %237 = arith.mulf %236, %51 : vector<1x256xf32>
    %238 = arith.addf %231, %237 : vector<1x256xf32>
    %c24 = arith.constant 24 : index
    %239 = memref.load %arg2[%c24] : memref<98xf32, #tpu.memory_space<smem>>
    %c0_83 = arith.constant 0 : index
    %c0_84 = arith.constant 0 : index
    %c51_85 = arith.constant 51 : index
    %240 = vector.load %arg5[%c0_83, %c0_84, %c51_85] : memref<2x1x358xf32, #tpu.memory_space<vmem>>, vector<1x1x256xf32>
    %241 = vector.shape_cast %240 : vector<1x1x256xf32> to vector<1x256xf32>
    %242 = vector.broadcast %239 : f32 to vector<1x256xf32>
    %243 = arith.mulf %241, %242 : vector<1x256xf32>
    %244 = arith.addf %238, %243 : vector<1x256xf32>
    %c25 = arith.constant 25 : index
    %245 = memref.load %arg2[%c25] : memref<98xf32, #tpu.memory_space<smem>>
    %c0_86 = arith.constant 0 : index
    %c0_87 = arith.constant 0 : index
    %c52 = arith.constant 52 : index
    %246 = vector.load %arg5[%c0_86, %c0_87, %c52] : memref<2x1x358xf32, #tpu.memory_space<vmem>>, vector<1x1x256xf32>
    %247 = vector.shape_cast %246 : vector<1x1x256xf32> to vector<1x256xf32>
    %248 = vector.broadcast %245 : f32 to vector<1x256xf32>
    %249 = arith.mulf %247, %248 : vector<1x256xf32>
    %250 = arith.mulf %249, %58 : vector<1x256xf32>
    %251 = arith.addf %244, %250 : vector<1x256xf32>
    %c26 = arith.constant 26 : index
    %252 = memref.load %arg2[%c26] : memref<98xf32, #tpu.memory_space<smem>>
    %c0_88 = arith.constant 0 : index
    %c0_89 = arith.constant 0 : index
    %c53 = arith.constant 53 : index
    %253 = vector.load %arg5[%c0_88, %c0_89, %c53] : memref<2x1x358xf32, #tpu.memory_space<vmem>>, vector<1x1x256xf32>
    %254 = vector.shape_cast %253 : vector<1x1x256xf32> to vector<1x256xf32>
    %255 = vector.broadcast %252 : f32 to vector<1x256xf32>
    %256 = arith.mulf %254, %255 : vector<1x256xf32>
    %257 = arith.mulf %256, %65 : vector<1x256xf32>
    %258 = arith.addf %251, %257 : vector<1x256xf32>
    %c27 = arith.constant 27 : index
    %259 = memref.load %arg2[%c27] : memref<98xf32, #tpu.memory_space<smem>>
    %c0_90 = arith.constant 0 : index
    %c0_91 = arith.constant 0 : index
    %c54 = arith.constant 54 : index
    %260 = vector.load %arg5[%c0_90, %c0_91, %c54] : memref<2x1x358xf32, #tpu.memory_space<vmem>>, vector<1x1x256xf32>
    %261 = vector.shape_cast %260 : vector<1x1x256xf32> to vector<1x256xf32>
    %262 = vector.broadcast %259 : f32 to vector<1x256xf32>
    %263 = arith.mulf %261, %262 : vector<1x256xf32>
    %264 = arith.mulf %263, %72 : vector<1x256xf32>
    %265 = arith.addf %258, %264 : vector<1x256xf32>
    %c28 = arith.constant 28 : index
    %266 = memref.load %arg2[%c28] : memref<98xf32, #tpu.memory_space<smem>>
    %c0_92 = arith.constant 0 : index
    %c0_93 = arith.constant 0 : index
    %c64 = arith.constant 64 : index
    %267 = vector.load %arg5[%c0_92, %c0_93, %c64] : memref<2x1x358xf32, #tpu.memory_space<vmem>>, vector<1x1x256xf32>
    %268 = vector.shape_cast %267 : vector<1x1x256xf32> to vector<1x256xf32>
    %269 = vector.broadcast %266 : f32 to vector<1x256xf32>
    %270 = arith.mulf %268, %269 : vector<1x256xf32>
    %271 = arith.mulf %270, %37 : vector<1x256xf32>
    %272 = arith.addf %265, %271 : vector<1x256xf32>
    %c29 = arith.constant 29 : index
    %273 = memref.load %arg2[%c29] : memref<98xf32, #tpu.memory_space<smem>>
    %c0_94 = arith.constant 0 : index
    %c0_95 = arith.constant 0 : index
    %c65 = arith.constant 65 : index
    %274 = vector.load %arg5[%c0_94, %c0_95, %c65] : memref<2x1x358xf32, #tpu.memory_space<vmem>>, vector<1x1x256xf32>
    %275 = vector.shape_cast %274 : vector<1x1x256xf32> to vector<1x256xf32>
    %276 = vector.broadcast %273 : f32 to vector<1x256xf32>
    %277 = arith.mulf %275, %276 : vector<1x256xf32>
    %278 = arith.mulf %277, %44 : vector<1x256xf32>
    %279 = arith.addf %272, %278 : vector<1x256xf32>
    %c30 = arith.constant 30 : index
    %280 = memref.load %arg2[%c30] : memref<98xf32, #tpu.memory_space<smem>>
    %c0_96 = arith.constant 0 : index
    %c0_97 = arith.constant 0 : index
    %c66 = arith.constant 66 : index
    %281 = vector.load %arg5[%c0_96, %c0_97, %c66] : memref<2x1x358xf32, #tpu.memory_space<vmem>>, vector<1x1x256xf32>
    %282 = vector.shape_cast %281 : vector<1x1x256xf32> to vector<1x256xf32>
    %283 = vector.broadcast %280 : f32 to vector<1x256xf32>
    %284 = arith.mulf %282, %283 : vector<1x256xf32>
    %285 = arith.mulf %284, %51 : vector<1x256xf32>
    %286 = arith.addf %279, %285 : vector<1x256xf32>
    %c31 = arith.constant 31 : index
    %287 = memref.load %arg2[%c31] : memref<98xf32, #tpu.memory_space<smem>>
    %c0_98 = arith.constant 0 : index
    %c0_99 = arith.constant 0 : index
    %c67 = arith.constant 67 : index
    %288 = vector.load %arg5[%c0_98, %c0_99, %c67] : memref<2x1x358xf32, #tpu.memory_space<vmem>>, vector<1x1x256xf32>
    %289 = vector.shape_cast %288 : vector<1x1x256xf32> to vector<1x256xf32>
    %290 = vector.broadcast %287 : f32 to vector<1x256xf32>
    %291 = arith.mulf %289, %290 : vector<1x256xf32>
    %292 = arith.addf %286, %291 : vector<1x256xf32>
    %c32_100 = arith.constant 32 : index
    %293 = memref.load %arg2[%c32_100] : memref<98xf32, #tpu.memory_space<smem>>
    %c0_101 = arith.constant 0 : index
    %c0_102 = arith.constant 0 : index
    %c68 = arith.constant 68 : index
    %294 = vector.load %arg5[%c0_101, %c0_102, %c68] : memref<2x1x358xf32, #tpu.memory_space<vmem>>, vector<1x1x256xf32>
    %295 = vector.shape_cast %294 : vector<1x1x256xf32> to vector<1x256xf32>
    %296 = vector.broadcast %293 : f32 to vector<1x256xf32>
    %297 = arith.mulf %295, %296 : vector<1x256xf32>
    %298 = arith.mulf %297, %58 : vector<1x256xf32>
    %299 = arith.addf %292, %298 : vector<1x256xf32>
    %c33_103 = arith.constant 33 : index
    %300 = memref.load %arg2[%c33_103] : memref<98xf32, #tpu.memory_space<smem>>
    %c0_104 = arith.constant 0 : index
    %c0_105 = arith.constant 0 : index
    %c69 = arith.constant 69 : index
    %301 = vector.load %arg5[%c0_104, %c0_105, %c69] : memref<2x1x358xf32, #tpu.memory_space<vmem>>, vector<1x1x256xf32>
    %302 = vector.shape_cast %301 : vector<1x1x256xf32> to vector<1x256xf32>
    %303 = vector.broadcast %300 : f32 to vector<1x256xf32>
    %304 = arith.mulf %302, %303 : vector<1x256xf32>
    %305 = arith.mulf %304, %65 : vector<1x256xf32>
    %306 = arith.addf %299, %305 : vector<1x256xf32>
    %c34_106 = arith.constant 34 : index
    %307 = memref.load %arg2[%c34_106] : memref<98xf32, #tpu.memory_space<smem>>
    %c0_107 = arith.constant 0 : index
    %c0_108 = arith.constant 0 : index
    %c70 = arith.constant 70 : index
    %308 = vector.load %arg5[%c0_107, %c0_108, %c70] : memref<2x1x358xf32, #tpu.memory_space<vmem>>, vector<1x1x256xf32>
    %309 = vector.shape_cast %308 : vector<1x1x256xf32> to vector<1x256xf32>
    %310 = vector.broadcast %307 : f32 to vector<1x256xf32>
    %311 = arith.mulf %309, %310 : vector<1x256xf32>
    %312 = arith.mulf %311, %72 : vector<1x256xf32>
    %313 = arith.addf %306, %312 : vector<1x256xf32>
    %c35_109 = arith.constant 35 : index
    %314 = memref.load %arg2[%c35_109] : memref<98xf32, #tpu.memory_space<smem>>
    %c0_110 = arith.constant 0 : index
    %c0_111 = arith.constant 0 : index
    %c80 = arith.constant 80 : index
    %315 = vector.load %arg5[%c0_110, %c0_111, %c80] : memref<2x1x358xf32, #tpu.memory_space<vmem>>, vector<1x1x256xf32>
    %316 = vector.shape_cast %315 : vector<1x1x256xf32> to vector<1x256xf32>
    %317 = vector.broadcast %314 : f32 to vector<1x256xf32>
    %318 = arith.mulf %316, %317 : vector<1x256xf32>
    %319 = arith.mulf %318, %37 : vector<1x256xf32>
    %320 = arith.addf %313, %319 : vector<1x256xf32>
    %c36_112 = arith.constant 36 : index
    %321 = memref.load %arg2[%c36_112] : memref<98xf32, #tpu.memory_space<smem>>
    %c0_113 = arith.constant 0 : index
    %c0_114 = arith.constant 0 : index
    %c81 = arith.constant 81 : index
    %322 = vector.load %arg5[%c0_113, %c0_114, %c81] : memref<2x1x358xf32, #tpu.memory_space<vmem>>, vector<1x1x256xf32>
    %323 = vector.shape_cast %322 : vector<1x1x256xf32> to vector<1x256xf32>
    %324 = vector.broadcast %321 : f32 to vector<1x256xf32>
    %325 = arith.mulf %323, %324 : vector<1x256xf32>
    %326 = arith.mulf %325, %44 : vector<1x256xf32>
    %327 = arith.addf %320, %326 : vector<1x256xf32>
    %c37_115 = arith.constant 37 : index
    %328 = memref.load %arg2[%c37_115] : memref<98xf32, #tpu.memory_space<smem>>
    %c0_116 = arith.constant 0 : index
    %c0_117 = arith.constant 0 : index
    %c82 = arith.constant 82 : index
    %329 = vector.load %arg5[%c0_116, %c0_117, %c82] : memref<2x1x358xf32, #tpu.memory_space<vmem>>, vector<1x1x256xf32>
    %330 = vector.shape_cast %329 : vector<1x1x256xf32> to vector<1x256xf32>
    %331 = vector.broadcast %328 : f32 to vector<1x256xf32>
    %332 = arith.mulf %330, %331 : vector<1x256xf32>
    %333 = arith.mulf %332, %51 : vector<1x256xf32>
    %334 = arith.addf %327, %333 : vector<1x256xf32>
    %c38_118 = arith.constant 38 : index
    %335 = memref.load %arg2[%c38_118] : memref<98xf32, #tpu.memory_space<smem>>
    %c0_119 = arith.constant 0 : index
    %c0_120 = arith.constant 0 : index
    %c83 = arith.constant 83 : index
    %336 = vector.load %arg5[%c0_119, %c0_120, %c83] : memref<2x1x358xf32, #tpu.memory_space<vmem>>, vector<1x1x256xf32>
    %337 = vector.shape_cast %336 : vector<1x1x256xf32> to vector<1x256xf32>
    %338 = vector.broadcast %335 : f32 to vector<1x256xf32>
    %339 = arith.mulf %337, %338 : vector<1x256xf32>
    %340 = arith.addf %334, %339 : vector<1x256xf32>
    %c39 = arith.constant 39 : index
    %341 = memref.load %arg2[%c39] : memref<98xf32, #tpu.memory_space<smem>>
    %c0_121 = arith.constant 0 : index
    %c0_122 = arith.constant 0 : index
    %c84 = arith.constant 84 : index
    %342 = vector.load %arg5[%c0_121, %c0_122, %c84] : memref<2x1x358xf32, #tpu.memory_space<vmem>>, vector<1x1x256xf32>
    %343 = vector.shape_cast %342 : vector<1x1x256xf32> to vector<1x256xf32>
    %344 = vector.broadcast %341 : f32 to vector<1x256xf32>
    %345 = arith.mulf %343, %344 : vector<1x256xf32>
    %346 = arith.mulf %345, %58 : vector<1x256xf32>
    %347 = arith.addf %340, %346 : vector<1x256xf32>
    %c40 = arith.constant 40 : index
    %348 = memref.load %arg2[%c40] : memref<98xf32, #tpu.memory_space<smem>>
    %c0_123 = arith.constant 0 : index
    %c0_124 = arith.constant 0 : index
    %c85 = arith.constant 85 : index
    %349 = vector.load %arg5[%c0_123, %c0_124, %c85] : memref<2x1x358xf32, #tpu.memory_space<vmem>>, vector<1x1x256xf32>
    %350 = vector.shape_cast %349 : vector<1x1x256xf32> to vector<1x256xf32>
    %351 = vector.broadcast %348 : f32 to vector<1x256xf32>
    %352 = arith.mulf %350, %351 : vector<1x256xf32>
    %353 = arith.mulf %352, %65 : vector<1x256xf32>
    %354 = arith.addf %347, %353 : vector<1x256xf32>
    %c41 = arith.constant 41 : index
    %355 = memref.load %arg2[%c41] : memref<98xf32, #tpu.memory_space<smem>>
    %c0_125 = arith.constant 0 : index
    %c0_126 = arith.constant 0 : index
    %c86 = arith.constant 86 : index
    %356 = vector.load %arg5[%c0_125, %c0_126, %c86] : memref<2x1x358xf32, #tpu.memory_space<vmem>>, vector<1x1x256xf32>
    %357 = vector.shape_cast %356 : vector<1x1x256xf32> to vector<1x256xf32>
    %358 = vector.broadcast %355 : f32 to vector<1x256xf32>
    %359 = arith.mulf %357, %358 : vector<1x256xf32>
    %360 = arith.mulf %359, %72 : vector<1x256xf32>
    %361 = arith.addf %354, %360 : vector<1x256xf32>
    %c42 = arith.constant 42 : index
    %362 = memref.load %arg2[%c42] : memref<98xf32, #tpu.memory_space<smem>>
    %c0_127 = arith.constant 0 : index
    %c0_128 = arith.constant 0 : index
    %c96 = arith.constant 96 : index
    %363 = vector.load %arg5[%c0_127, %c0_128, %c96] : memref<2x1x358xf32, #tpu.memory_space<vmem>>, vector<1x1x256xf32>
    %364 = vector.shape_cast %363 : vector<1x1x256xf32> to vector<1x256xf32>
    %365 = vector.broadcast %362 : f32 to vector<1x256xf32>
    %366 = arith.mulf %364, %365 : vector<1x256xf32>
    %367 = arith.mulf %366, %37 : vector<1x256xf32>
    %368 = arith.addf %361, %367 : vector<1x256xf32>
    %c43 = arith.constant 43 : index
    %369 = memref.load %arg2[%c43] : memref<98xf32, #tpu.memory_space<smem>>
    %c0_129 = arith.constant 0 : index
    %c0_130 = arith.constant 0 : index
    %c97 = arith.constant 97 : index
    %370 = vector.load %arg5[%c0_129, %c0_130, %c97] : memref<2x1x358xf32, #tpu.memory_space<vmem>>, vector<1x1x256xf32>
    %371 = vector.shape_cast %370 : vector<1x1x256xf32> to vector<1x256xf32>
    %372 = vector.broadcast %369 : f32 to vector<1x256xf32>
    %373 = arith.mulf %371, %372 : vector<1x256xf32>
    %374 = arith.mulf %373, %44 : vector<1x256xf32>
    %375 = arith.addf %368, %374 : vector<1x256xf32>
    %c44 = arith.constant 44 : index
    %376 = memref.load %arg2[%c44] : memref<98xf32, #tpu.memory_space<smem>>
    %c0_131 = arith.constant 0 : index
    %c0_132 = arith.constant 0 : index
    %c98 = arith.constant 98 : index
    %377 = vector.load %arg5[%c0_131, %c0_132, %c98] : memref<2x1x358xf32, #tpu.memory_space<vmem>>, vector<1x1x256xf32>
    %378 = vector.shape_cast %377 : vector<1x1x256xf32> to vector<1x256xf32>
    %379 = vector.broadcast %376 : f32 to vector<1x256xf32>
    %380 = arith.mulf %378, %379 : vector<1x256xf32>
    %381 = arith.mulf %380, %51 : vector<1x256xf32>
    %382 = arith.addf %375, %381 : vector<1x256xf32>
    %c45 = arith.constant 45 : index
    %383 = memref.load %arg2[%c45] : memref<98xf32, #tpu.memory_space<smem>>
    %c0_133 = arith.constant 0 : index
    %c0_134 = arith.constant 0 : index
    %c99 = arith.constant 99 : index
    %384 = vector.load %arg5[%c0_133, %c0_134, %c99] : memref<2x1x358xf32, #tpu.memory_space<vmem>>, vector<1x1x256xf32>
    %385 = vector.shape_cast %384 : vector<1x1x256xf32> to vector<1x256xf32>
    %386 = vector.broadcast %383 : f32 to vector<1x256xf32>
    %387 = arith.mulf %385, %386 : vector<1x256xf32>
    %388 = arith.addf %382, %387 : vector<1x256xf32>
    %c46 = arith.constant 46 : index
    %389 = memref.load %arg2[%c46] : memref<98xf32, #tpu.memory_space<smem>>
    %c0_135 = arith.constant 0 : index
    %c0_136 = arith.constant 0 : index
    %c100 = arith.constant 100 : index
    %390 = vector.load %arg5[%c0_135, %c0_136, %c100] : memref<2x1x358xf32, #tpu.memory_space<vmem>>, vector<1x1x256xf32>
    %391 = vector.shape_cast %390 : vector<1x1x256xf32> to vector<1x256xf32>
    %392 = vector.broadcast %389 : f32 to vector<1x256xf32>
    %393 = arith.mulf %391, %392 : vector<1x256xf32>
    %394 = arith.mulf %393, %58 : vector<1x256xf32>
    %395 = arith.addf %388, %394 : vector<1x256xf32>
    %c47 = arith.constant 47 : index
    %396 = memref.load %arg2[%c47] : memref<98xf32, #tpu.memory_space<smem>>
    %c0_137 = arith.constant 0 : index
    %c0_138 = arith.constant 0 : index
    %c101 = arith.constant 101 : index
    %397 = vector.load %arg5[%c0_137, %c0_138, %c101] : memref<2x1x358xf32, #tpu.memory_space<vmem>>, vector<1x1x256xf32>
    %398 = vector.shape_cast %397 : vector<1x1x256xf32> to vector<1x256xf32>
    %399 = vector.broadcast %396 : f32 to vector<1x256xf32>
    %400 = arith.mulf %398, %399 : vector<1x256xf32>
    %401 = arith.mulf %400, %65 : vector<1x256xf32>
    %402 = arith.addf %395, %401 : vector<1x256xf32>
    %c48_139 = arith.constant 48 : index
    %403 = memref.load %arg2[%c48_139] : memref<98xf32, #tpu.memory_space<smem>>
    %c0_140 = arith.constant 0 : index
    %c0_141 = arith.constant 0 : index
    %c102 = arith.constant 102 : index
    %404 = vector.load %arg5[%c0_140, %c0_141, %c102] : memref<2x1x358xf32, #tpu.memory_space<vmem>>, vector<1x1x256xf32>
    %405 = vector.shape_cast %404 : vector<1x1x256xf32> to vector<1x256xf32>
    %406 = vector.broadcast %403 : f32 to vector<1x256xf32>
    %407 = arith.mulf %405, %406 : vector<1x256xf32>
    %408 = arith.mulf %407, %72 : vector<1x256xf32>
    %409 = arith.addf %402, %408 : vector<1x256xf32>
    %c49_142 = arith.constant 49 : index
    %410 = memref.load %arg2[%c49_142] : memref<98xf32, #tpu.memory_space<smem>>
    %c1_143 = arith.constant 1 : index
    %c0_144 = arith.constant 0 : index
    %c0_145 = arith.constant 0 : index
    %411 = vector.load %arg5[%c1_143, %c0_144, %c0_145] : memref<2x1x358xf32, #tpu.memory_space<vmem>>, vector<1x1x256xf32>
    %412 = vector.shape_cast %411 : vector<1x1x256xf32> to vector<1x256xf32>
    %413 = vector.broadcast %410 : f32 to vector<1x256xf32>
    %414 = arith.mulf %412, %413 : vector<1x256xf32>
    %415 = arith.mulf %414, %37 : vector<1x256xf32>
    %416 = arith.addf %409, %415 : vector<1x256xf32>
    %c50_146 = arith.constant 50 : index
    %417 = memref.load %arg2[%c50_146] : memref<98xf32, #tpu.memory_space<smem>>
    %c1_147 = arith.constant 1 : index
    %c0_148 = arith.constant 0 : index
    %c1_149 = arith.constant 1 : index
    %418 = vector.load %arg5[%c1_147, %c0_148, %c1_149] : memref<2x1x358xf32, #tpu.memory_space<vmem>>, vector<1x1x256xf32>
    %419 = vector.shape_cast %418 : vector<1x1x256xf32> to vector<1x256xf32>
    %420 = vector.broadcast %417 : f32 to vector<1x256xf32>
    %421 = arith.mulf %419, %420 : vector<1x256xf32>
    %422 = arith.mulf %421, %44 : vector<1x256xf32>
    %423 = arith.addf %416, %422 : vector<1x256xf32>
    %c51_150 = arith.constant 51 : index
    %424 = memref.load %arg2[%c51_150] : memref<98xf32, #tpu.memory_space<smem>>
    %c1_151 = arith.constant 1 : index
    %c0_152 = arith.constant 0 : index
    %c2_153 = arith.constant 2 : index
    %425 = vector.load %arg5[%c1_151, %c0_152, %c2_153] : memref<2x1x358xf32, #tpu.memory_space<vmem>>, vector<1x1x256xf32>
    %426 = vector.shape_cast %425 : vector<1x1x256xf32> to vector<1x256xf32>
    %427 = vector.broadcast %424 : f32 to vector<1x256xf32>
    %428 = arith.mulf %426, %427 : vector<1x256xf32>
    %429 = arith.mulf %428, %51 : vector<1x256xf32>
    %430 = arith.addf %423, %429 : vector<1x256xf32>
    %c52_154 = arith.constant 52 : index
    %431 = memref.load %arg2[%c52_154] : memref<98xf32, #tpu.memory_space<smem>>
    %c1_155 = arith.constant 1 : index
    %c0_156 = arith.constant 0 : index
    %c3_157 = arith.constant 3 : index
    %432 = vector.load %arg5[%c1_155, %c0_156, %c3_157] : memref<2x1x358xf32, #tpu.memory_space<vmem>>, vector<1x1x256xf32>
    %433 = vector.shape_cast %432 : vector<1x1x256xf32> to vector<1x256xf32>
    %434 = vector.broadcast %431 : f32 to vector<1x256xf32>
    %435 = arith.mulf %433, %434 : vector<1x256xf32>
    %436 = arith.addf %430, %435 : vector<1x256xf32>
    %c53_158 = arith.constant 53 : index
    %437 = memref.load %arg2[%c53_158] : memref<98xf32, #tpu.memory_space<smem>>
    %c1_159 = arith.constant 1 : index
    %c0_160 = arith.constant 0 : index
    %c4_161 = arith.constant 4 : index
    %438 = vector.load %arg5[%c1_159, %c0_160, %c4_161] : memref<2x1x358xf32, #tpu.memory_space<vmem>>, vector<1x1x256xf32>
    %439 = vector.shape_cast %438 : vector<1x1x256xf32> to vector<1x256xf32>
    %440 = vector.broadcast %437 : f32 to vector<1x256xf32>
    %441 = arith.mulf %439, %440 : vector<1x256xf32>
    %442 = arith.mulf %441, %58 : vector<1x256xf32>
    %443 = arith.addf %436, %442 : vector<1x256xf32>
    %c54_162 = arith.constant 54 : index
    %444 = memref.load %arg2[%c54_162] : memref<98xf32, #tpu.memory_space<smem>>
    %c1_163 = arith.constant 1 : index
    %c0_164 = arith.constant 0 : index
    %c5_165 = arith.constant 5 : index
    %445 = vector.load %arg5[%c1_163, %c0_164, %c5_165] : memref<2x1x358xf32, #tpu.memory_space<vmem>>, vector<1x1x256xf32>
    %446 = vector.shape_cast %445 : vector<1x1x256xf32> to vector<1x256xf32>
    %447 = vector.broadcast %444 : f32 to vector<1x256xf32>
    %448 = arith.mulf %446, %447 : vector<1x256xf32>
    %449 = arith.mulf %448, %65 : vector<1x256xf32>
    %450 = arith.addf %443, %449 : vector<1x256xf32>
    %c55 = arith.constant 55 : index
    %451 = memref.load %arg2[%c55] : memref<98xf32, #tpu.memory_space<smem>>
    %c1_166 = arith.constant 1 : index
    %c0_167 = arith.constant 0 : index
    %c6_168 = arith.constant 6 : index
    %452 = vector.load %arg5[%c1_166, %c0_167, %c6_168] : memref<2x1x358xf32, #tpu.memory_space<vmem>>, vector<1x1x256xf32>
    %453 = vector.shape_cast %452 : vector<1x1x256xf32> to vector<1x256xf32>
    %454 = vector.broadcast %451 : f32 to vector<1x256xf32>
    %455 = arith.mulf %453, %454 : vector<1x256xf32>
    %456 = arith.mulf %455, %72 : vector<1x256xf32>
    %457 = arith.addf %450, %456 : vector<1x256xf32>
    %c56 = arith.constant 56 : index
    %458 = memref.load %arg2[%c56] : memref<98xf32, #tpu.memory_space<smem>>
    %c1_169 = arith.constant 1 : index
    %c0_170 = arith.constant 0 : index
    %c16_171 = arith.constant 16 : index
    %459 = vector.load %arg5[%c1_169, %c0_170, %c16_171] : memref<2x1x358xf32, #tpu.memory_space<vmem>>, vector<1x1x256xf32>
    %460 = vector.shape_cast %459 : vector<1x1x256xf32> to vector<1x256xf32>
    %461 = vector.broadcast %458 : f32 to vector<1x256xf32>
    %462 = arith.mulf %460, %461 : vector<1x256xf32>
    %463 = arith.mulf %462, %37 : vector<1x256xf32>
    %464 = arith.addf %457, %463 : vector<1x256xf32>
    %c57 = arith.constant 57 : index
    %465 = memref.load %arg2[%c57] : memref<98xf32, #tpu.memory_space<smem>>
    %c1_172 = arith.constant 1 : index
    %c0_173 = arith.constant 0 : index
    %c17_174 = arith.constant 17 : index
    %466 = vector.load %arg5[%c1_172, %c0_173, %c17_174] : memref<2x1x358xf32, #tpu.memory_space<vmem>>, vector<1x1x256xf32>
    %467 = vector.shape_cast %466 : vector<1x1x256xf32> to vector<1x256xf32>
    %468 = vector.broadcast %465 : f32 to vector<1x256xf32>
    %469 = arith.mulf %467, %468 : vector<1x256xf32>
    %470 = arith.mulf %469, %44 : vector<1x256xf32>
    %471 = arith.addf %464, %470 : vector<1x256xf32>
    %c58 = arith.constant 58 : index
    %472 = memref.load %arg2[%c58] : memref<98xf32, #tpu.memory_space<smem>>
    %c1_175 = arith.constant 1 : index
    %c0_176 = arith.constant 0 : index
    %c18_177 = arith.constant 18 : index
    %473 = vector.load %arg5[%c1_175, %c0_176, %c18_177] : memref<2x1x358xf32, #tpu.memory_space<vmem>>, vector<1x1x256xf32>
    %474 = vector.shape_cast %473 : vector<1x1x256xf32> to vector<1x256xf32>
    %475 = vector.broadcast %472 : f32 to vector<1x256xf32>
    %476 = arith.mulf %474, %475 : vector<1x256xf32>
    %477 = arith.mulf %476, %51 : vector<1x256xf32>
    %478 = arith.addf %471, %477 : vector<1x256xf32>
    %c59 = arith.constant 59 : index
    %479 = memref.load %arg2[%c59] : memref<98xf32, #tpu.memory_space<smem>>
    %c1_178 = arith.constant 1 : index
    %c0_179 = arith.constant 0 : index
    %c19_180 = arith.constant 19 : index
    %480 = vector.load %arg5[%c1_178, %c0_179, %c19_180] : memref<2x1x358xf32, #tpu.memory_space<vmem>>, vector<1x1x256xf32>
    %481 = vector.shape_cast %480 : vector<1x1x256xf32> to vector<1x256xf32>
    %482 = vector.broadcast %479 : f32 to vector<1x256xf32>
    %483 = arith.mulf %481, %482 : vector<1x256xf32>
    %484 = arith.addf %478, %483 : vector<1x256xf32>
    %c60 = arith.constant 60 : index
    %485 = memref.load %arg2[%c60] : memref<98xf32, #tpu.memory_space<smem>>
    %c1_181 = arith.constant 1 : index
    %c0_182 = arith.constant 0 : index
    %c20_183 = arith.constant 20 : index
    %486 = vector.load %arg5[%c1_181, %c0_182, %c20_183] : memref<2x1x358xf32, #tpu.memory_space<vmem>>, vector<1x1x256xf32>
    %487 = vector.shape_cast %486 : vector<1x1x256xf32> to vector<1x256xf32>
    %488 = vector.broadcast %485 : f32 to vector<1x256xf32>
    %489 = arith.mulf %487, %488 : vector<1x256xf32>
    %490 = arith.mulf %489, %58 : vector<1x256xf32>
    %491 = arith.addf %484, %490 : vector<1x256xf32>
    %c61 = arith.constant 61 : index
    %492 = memref.load %arg2[%c61] : memref<98xf32, #tpu.memory_space<smem>>
    %c1_184 = arith.constant 1 : index
    %c0_185 = arith.constant 0 : index
    %c21_186 = arith.constant 21 : index
    %493 = vector.load %arg5[%c1_184, %c0_185, %c21_186] : memref<2x1x358xf32, #tpu.memory_space<vmem>>, vector<1x1x256xf32>
    %494 = vector.shape_cast %493 : vector<1x1x256xf32> to vector<1x256xf32>
    %495 = vector.broadcast %492 : f32 to vector<1x256xf32>
    %496 = arith.mulf %494, %495 : vector<1x256xf32>
    %497 = arith.mulf %496, %65 : vector<1x256xf32>
    %498 = arith.addf %491, %497 : vector<1x256xf32>
    %c62 = arith.constant 62 : index
    %499 = memref.load %arg2[%c62] : memref<98xf32, #tpu.memory_space<smem>>
    %c1_187 = arith.constant 1 : index
    %c0_188 = arith.constant 0 : index
    %c22_189 = arith.constant 22 : index
    %500 = vector.load %arg5[%c1_187, %c0_188, %c22_189] : memref<2x1x358xf32, #tpu.memory_space<vmem>>, vector<1x1x256xf32>
    %501 = vector.shape_cast %500 : vector<1x1x256xf32> to vector<1x256xf32>
    %502 = vector.broadcast %499 : f32 to vector<1x256xf32>
    %503 = arith.mulf %501, %502 : vector<1x256xf32>
    %504 = arith.mulf %503, %72 : vector<1x256xf32>
    %505 = arith.addf %498, %504 : vector<1x256xf32>
    %c63 = arith.constant 63 : index
    %506 = memref.load %arg2[%c63] : memref<98xf32, #tpu.memory_space<smem>>
    %c1_190 = arith.constant 1 : index
    %c0_191 = arith.constant 0 : index
    %c32_192 = arith.constant 32 : index
    %507 = vector.load %arg5[%c1_190, %c0_191, %c32_192] : memref<2x1x358xf32, #tpu.memory_space<vmem>>, vector<1x1x256xf32>
    %508 = vector.shape_cast %507 : vector<1x1x256xf32> to vector<1x256xf32>
    %509 = vector.broadcast %506 : f32 to vector<1x256xf32>
    %510 = arith.mulf %508, %509 : vector<1x256xf32>
    %511 = arith.mulf %510, %37 : vector<1x256xf32>
    %512 = arith.addf %505, %511 : vector<1x256xf32>
    %c64_193 = arith.constant 64 : index
    %513 = memref.load %arg2[%c64_193] : memref<98xf32, #tpu.memory_space<smem>>
    %c1_194 = arith.constant 1 : index
    %c0_195 = arith.constant 0 : index
    %c33_196 = arith.constant 33 : index
    %514 = vector.load %arg5[%c1_194, %c0_195, %c33_196] : memref<2x1x358xf32, #tpu.memory_space<vmem>>, vector<1x1x256xf32>
    %515 = vector.shape_cast %514 : vector<1x1x256xf32> to vector<1x256xf32>
    %516 = vector.broadcast %513 : f32 to vector<1x256xf32>
    %517 = arith.mulf %515, %516 : vector<1x256xf32>
    %518 = arith.mulf %517, %44 : vector<1x256xf32>
    %519 = arith.addf %512, %518 : vector<1x256xf32>
    %c65_197 = arith.constant 65 : index
    %520 = memref.load %arg2[%c65_197] : memref<98xf32, #tpu.memory_space<smem>>
    %c1_198 = arith.constant 1 : index
    %c0_199 = arith.constant 0 : index
    %c34_200 = arith.constant 34 : index
    %521 = vector.load %arg5[%c1_198, %c0_199, %c34_200] : memref<2x1x358xf32, #tpu.memory_space<vmem>>, vector<1x1x256xf32>
    %522 = vector.shape_cast %521 : vector<1x1x256xf32> to vector<1x256xf32>
    %523 = vector.broadcast %520 : f32 to vector<1x256xf32>
    %524 = arith.mulf %522, %523 : vector<1x256xf32>
    %525 = arith.mulf %524, %51 : vector<1x256xf32>
    %526 = arith.addf %519, %525 : vector<1x256xf32>
    %c66_201 = arith.constant 66 : index
    %527 = memref.load %arg2[%c66_201] : memref<98xf32, #tpu.memory_space<smem>>
    %c1_202 = arith.constant 1 : index
    %c0_203 = arith.constant 0 : index
    %c35_204 = arith.constant 35 : index
    %528 = vector.load %arg5[%c1_202, %c0_203, %c35_204] : memref<2x1x358xf32, #tpu.memory_space<vmem>>, vector<1x1x256xf32>
    %529 = vector.shape_cast %528 : vector<1x1x256xf32> to vector<1x256xf32>
    %530 = vector.broadcast %527 : f32 to vector<1x256xf32>
    %531 = arith.mulf %529, %530 : vector<1x256xf32>
    %532 = arith.addf %526, %531 : vector<1x256xf32>
    %c67_205 = arith.constant 67 : index
    %533 = memref.load %arg2[%c67_205] : memref<98xf32, #tpu.memory_space<smem>>
    %c1_206 = arith.constant 1 : index
    %c0_207 = arith.constant 0 : index
    %c36_208 = arith.constant 36 : index
    %534 = vector.load %arg5[%c1_206, %c0_207, %c36_208] : memref<2x1x358xf32, #tpu.memory_space<vmem>>, vector<1x1x256xf32>
    %535 = vector.shape_cast %534 : vector<1x1x256xf32> to vector<1x256xf32>
    %536 = vector.broadcast %533 : f32 to vector<1x256xf32>
    %537 = arith.mulf %535, %536 : vector<1x256xf32>
    %538 = arith.mulf %537, %58 : vector<1x256xf32>
    %539 = arith.addf %532, %538 : vector<1x256xf32>
    %c68_209 = arith.constant 68 : index
    %540 = memref.load %arg2[%c68_209] : memref<98xf32, #tpu.memory_space<smem>>
    %c1_210 = arith.constant 1 : index
    %c0_211 = arith.constant 0 : index
    %c37_212 = arith.constant 37 : index
    %541 = vector.load %arg5[%c1_210, %c0_211, %c37_212] : memref<2x1x358xf32, #tpu.memory_space<vmem>>, vector<1x1x256xf32>
    %542 = vector.shape_cast %541 : vector<1x1x256xf32> to vector<1x256xf32>
    %543 = vector.broadcast %540 : f32 to vector<1x256xf32>
    %544 = arith.mulf %542, %543 : vector<1x256xf32>
    %545 = arith.mulf %544, %65 : vector<1x256xf32>
    %546 = arith.addf %539, %545 : vector<1x256xf32>
    %c69_213 = arith.constant 69 : index
    %547 = memref.load %arg2[%c69_213] : memref<98xf32, #tpu.memory_space<smem>>
    %c1_214 = arith.constant 1 : index
    %c0_215 = arith.constant 0 : index
    %c38_216 = arith.constant 38 : index
    %548 = vector.load %arg5[%c1_214, %c0_215, %c38_216] : memref<2x1x358xf32, #tpu.memory_space<vmem>>, vector<1x1x256xf32>
    %549 = vector.shape_cast %548 : vector<1x1x256xf32> to vector<1x256xf32>
    %550 = vector.broadcast %547 : f32 to vector<1x256xf32>
    %551 = arith.mulf %549, %550 : vector<1x256xf32>
    %552 = arith.mulf %551, %72 : vector<1x256xf32>
    %553 = arith.addf %546, %552 : vector<1x256xf32>
    %c70_217 = arith.constant 70 : index
    %554 = memref.load %arg2[%c70_217] : memref<98xf32, #tpu.memory_space<smem>>
    %c1_218 = arith.constant 1 : index
    %c0_219 = arith.constant 0 : index
    %c48_220 = arith.constant 48 : index
    %555 = vector.load %arg5[%c1_218, %c0_219, %c48_220] : memref<2x1x358xf32, #tpu.memory_space<vmem>>, vector<1x1x256xf32>
    %556 = vector.shape_cast %555 : vector<1x1x256xf32> to vector<1x256xf32>
    %557 = vector.broadcast %554 : f32 to vector<1x256xf32>
    %558 = arith.mulf %556, %557 : vector<1x256xf32>
    %559 = arith.mulf %558, %37 : vector<1x256xf32>
    %560 = arith.addf %553, %559 : vector<1x256xf32>
    %c71 = arith.constant 71 : index
    %561 = memref.load %arg2[%c71] : memref<98xf32, #tpu.memory_space<smem>>
    %c1_221 = arith.constant 1 : index
    %c0_222 = arith.constant 0 : index
    %c49_223 = arith.constant 49 : index
    %562 = vector.load %arg5[%c1_221, %c0_222, %c49_223] : memref<2x1x358xf32, #tpu.memory_space<vmem>>, vector<1x1x256xf32>
    %563 = vector.shape_cast %562 : vector<1x1x256xf32> to vector<1x256xf32>
    %564 = vector.broadcast %561 : f32 to vector<1x256xf32>
    %565 = arith.mulf %563, %564 : vector<1x256xf32>
    %566 = arith.mulf %565, %44 : vector<1x256xf32>
    %567 = arith.addf %560, %566 : vector<1x256xf32>
    %c72 = arith.constant 72 : index
    %568 = memref.load %arg2[%c72] : memref<98xf32, #tpu.memory_space<smem>>
    %c1_224 = arith.constant 1 : index
    %c0_225 = arith.constant 0 : index
    %c50_226 = arith.constant 50 : index
    %569 = vector.load %arg5[%c1_224, %c0_225, %c50_226] : memref<2x1x358xf32, #tpu.memory_space<vmem>>, vector<1x1x256xf32>
    %570 = vector.shape_cast %569 : vector<1x1x256xf32> to vector<1x256xf32>
    %571 = vector.broadcast %568 : f32 to vector<1x256xf32>
    %572 = arith.mulf %570, %571 : vector<1x256xf32>
    %573 = arith.mulf %572, %51 : vector<1x256xf32>
    %574 = arith.addf %567, %573 : vector<1x256xf32>
    %c73 = arith.constant 73 : index
    %575 = memref.load %arg2[%c73] : memref<98xf32, #tpu.memory_space<smem>>
    %c1_227 = arith.constant 1 : index
    %c0_228 = arith.constant 0 : index
    %c51_229 = arith.constant 51 : index
    %576 = vector.load %arg5[%c1_227, %c0_228, %c51_229] : memref<2x1x358xf32, #tpu.memory_space<vmem>>, vector<1x1x256xf32>
    %577 = vector.shape_cast %576 : vector<1x1x256xf32> to vector<1x256xf32>
    %578 = vector.broadcast %575 : f32 to vector<1x256xf32>
    %579 = arith.mulf %577, %578 : vector<1x256xf32>
    %580 = arith.addf %574, %579 : vector<1x256xf32>
    %c74 = arith.constant 74 : index
    %581 = memref.load %arg2[%c74] : memref<98xf32, #tpu.memory_space<smem>>
    %c1_230 = arith.constant 1 : index
    %c0_231 = arith.constant 0 : index
    %c52_232 = arith.constant 52 : index
    %582 = vector.load %arg5[%c1_230, %c0_231, %c52_232] : memref<2x1x358xf32, #tpu.memory_space<vmem>>, vector<1x1x256xf32>
    %583 = vector.shape_cast %582 : vector<1x1x256xf32> to vector<1x256xf32>
    %584 = vector.broadcast %581 : f32 to vector<1x256xf32>
    %585 = arith.mulf %583, %584 : vector<1x256xf32>
    %586 = arith.mulf %585, %58 : vector<1x256xf32>
    %587 = arith.addf %580, %586 : vector<1x256xf32>
    %c75 = arith.constant 75 : index
    %588 = memref.load %arg2[%c75] : memref<98xf32, #tpu.memory_space<smem>>
    %c1_233 = arith.constant 1 : index
    %c0_234 = arith.constant 0 : index
    %c53_235 = arith.constant 53 : index
    %589 = vector.load %arg5[%c1_233, %c0_234, %c53_235] : memref<2x1x358xf32, #tpu.memory_space<vmem>>, vector<1x1x256xf32>
    %590 = vector.shape_cast %589 : vector<1x1x256xf32> to vector<1x256xf32>
    %591 = vector.broadcast %588 : f32 to vector<1x256xf32>
    %592 = arith.mulf %590, %591 : vector<1x256xf32>
    %593 = arith.mulf %592, %65 : vector<1x256xf32>
    %594 = arith.addf %587, %593 : vector<1x256xf32>
    %c76 = arith.constant 76 : index
    %595 = memref.load %arg2[%c76] : memref<98xf32, #tpu.memory_space<smem>>
    %c1_236 = arith.constant 1 : index
    %c0_237 = arith.constant 0 : index
    %c54_238 = arith.constant 54 : index
    %596 = vector.load %arg5[%c1_236, %c0_237, %c54_238] : memref<2x1x358xf32, #tpu.memory_space<vmem>>, vector<1x1x256xf32>
    %597 = vector.shape_cast %596 : vector<1x1x256xf32> to vector<1x256xf32>
    %598 = vector.broadcast %595 : f32 to vector<1x256xf32>
    %599 = arith.mulf %597, %598 : vector<1x256xf32>
    %600 = arith.mulf %599, %72 : vector<1x256xf32>
    %601 = arith.addf %594, %600 : vector<1x256xf32>
    %c77 = arith.constant 77 : index
    %602 = memref.load %arg2[%c77] : memref<98xf32, #tpu.memory_space<smem>>
    %c1_239 = arith.constant 1 : index
    %c0_240 = arith.constant 0 : index
    %c64_241 = arith.constant 64 : index
    %603 = vector.load %arg5[%c1_239, %c0_240, %c64_241] : memref<2x1x358xf32, #tpu.memory_space<vmem>>, vector<1x1x256xf32>
    %604 = vector.shape_cast %603 : vector<1x1x256xf32> to vector<1x256xf32>
    %605 = vector.broadcast %602 : f32 to vector<1x256xf32>
    %606 = arith.mulf %604, %605 : vector<1x256xf32>
    %607 = arith.mulf %606, %37 : vector<1x256xf32>
    %608 = arith.addf %601, %607 : vector<1x256xf32>
    %c78 = arith.constant 78 : index
    %609 = memref.load %arg2[%c78] : memref<98xf32, #tpu.memory_space<smem>>
    %c1_242 = arith.constant 1 : index
    %c0_243 = arith.constant 0 : index
    %c65_244 = arith.constant 65 : index
    %610 = vector.load %arg5[%c1_242, %c0_243, %c65_244] : memref<2x1x358xf32, #tpu.memory_space<vmem>>, vector<1x1x256xf32>
    %611 = vector.shape_cast %610 : vector<1x1x256xf32> to vector<1x256xf32>
    %612 = vector.broadcast %609 : f32 to vector<1x256xf32>
    %613 = arith.mulf %611, %612 : vector<1x256xf32>
    %614 = arith.mulf %613, %44 : vector<1x256xf32>
    %615 = arith.addf %608, %614 : vector<1x256xf32>
    %c79 = arith.constant 79 : index
    %616 = memref.load %arg2[%c79] : memref<98xf32, #tpu.memory_space<smem>>
    %c1_245 = arith.constant 1 : index
    %c0_246 = arith.constant 0 : index
    %c66_247 = arith.constant 66 : index
    %617 = vector.load %arg5[%c1_245, %c0_246, %c66_247] : memref<2x1x358xf32, #tpu.memory_space<vmem>>, vector<1x1x256xf32>
    %618 = vector.shape_cast %617 : vector<1x1x256xf32> to vector<1x256xf32>
    %619 = vector.broadcast %616 : f32 to vector<1x256xf32>
    %620 = arith.mulf %618, %619 : vector<1x256xf32>
    %621 = arith.mulf %620, %51 : vector<1x256xf32>
    %622 = arith.addf %615, %621 : vector<1x256xf32>
    %c80_248 = arith.constant 80 : index
    %623 = memref.load %arg2[%c80_248] : memref<98xf32, #tpu.memory_space<smem>>
    %c1_249 = arith.constant 1 : index
    %c0_250 = arith.constant 0 : index
    %c67_251 = arith.constant 67 : index
    %624 = vector.load %arg5[%c1_249, %c0_250, %c67_251] : memref<2x1x358xf32, #tpu.memory_space<vmem>>, vector<1x1x256xf32>
    %625 = vector.shape_cast %624 : vector<1x1x256xf32> to vector<1x256xf32>
    %626 = vector.broadcast %623 : f32 to vector<1x256xf32>
    %627 = arith.mulf %625, %626 : vector<1x256xf32>
    %628 = arith.addf %622, %627 : vector<1x256xf32>
    %c81_252 = arith.constant 81 : index
    %629 = memref.load %arg2[%c81_252] : memref<98xf32, #tpu.memory_space<smem>>
    %c1_253 = arith.constant 1 : index
    %c0_254 = arith.constant 0 : index
    %c68_255 = arith.constant 68 : index
    %630 = vector.load %arg5[%c1_253, %c0_254, %c68_255] : memref<2x1x358xf32, #tpu.memory_space<vmem>>, vector<1x1x256xf32>
    %631 = vector.shape_cast %630 : vector<1x1x256xf32> to vector<1x256xf32>
    %632 = vector.broadcast %629 : f32 to vector<1x256xf32>
    %633 = arith.mulf %631, %632 : vector<1x256xf32>
    %634 = arith.mulf %633, %58 : vector<1x256xf32>
    %635 = arith.addf %628, %634 : vector<1x256xf32>
    %c82_256 = arith.constant 82 : index
    %636 = memref.load %arg2[%c82_256] : memref<98xf32, #tpu.memory_space<smem>>
    %c1_257 = arith.constant 1 : index
    %c0_258 = arith.constant 0 : index
    %c69_259 = arith.constant 69 : index
    %637 = vector.load %arg5[%c1_257, %c0_258, %c69_259] : memref<2x1x358xf32, #tpu.memory_space<vmem>>, vector<1x1x256xf32>
    %638 = vector.shape_cast %637 : vector<1x1x256xf32> to vector<1x256xf32>
    %639 = vector.broadcast %636 : f32 to vector<1x256xf32>
    %640 = arith.mulf %638, %639 : vector<1x256xf32>
    %641 = arith.mulf %640, %65 : vector<1x256xf32>
    %642 = arith.addf %635, %641 : vector<1x256xf32>
    %c83_260 = arith.constant 83 : index
    %643 = memref.load %arg2[%c83_260] : memref<98xf32, #tpu.memory_space<smem>>
    %c1_261 = arith.constant 1 : index
    %c0_262 = arith.constant 0 : index
    %c70_263 = arith.constant 70 : index
    %644 = vector.load %arg5[%c1_261, %c0_262, %c70_263] : memref<2x1x358xf32, #tpu.memory_space<vmem>>, vector<1x1x256xf32>
    %645 = vector.shape_cast %644 : vector<1x1x256xf32> to vector<1x256xf32>
    %646 = vector.broadcast %643 : f32 to vector<1x256xf32>
    %647 = arith.mulf %645, %646 : vector<1x256xf32>
    %648 = arith.mulf %647, %72 : vector<1x256xf32>
    %649 = arith.addf %642, %648 : vector<1x256xf32>
    %c84_264 = arith.constant 84 : index
    %650 = memref.load %arg2[%c84_264] : memref<98xf32, #tpu.memory_space<smem>>
    %c1_265 = arith.constant 1 : index
    %c0_266 = arith.constant 0 : index
    %c80_267 = arith.constant 80 : index
    %651 = vector.load %arg5[%c1_265, %c0_266, %c80_267] : memref<2x1x358xf32, #tpu.memory_space<vmem>>, vector<1x1x256xf32>
    %652 = vector.shape_cast %651 : vector<1x1x256xf32> to vector<1x256xf32>
    %653 = vector.broadcast %650 : f32 to vector<1x256xf32>
    %654 = arith.mulf %652, %653 : vector<1x256xf32>
    %655 = arith.mulf %654, %37 : vector<1x256xf32>
    %656 = arith.addf %649, %655 : vector<1x256xf32>
    %c85_268 = arith.constant 85 : index
    %657 = memref.load %arg2[%c85_268] : memref<98xf32, #tpu.memory_space<smem>>
    %c1_269 = arith.constant 1 : index
    %c0_270 = arith.constant 0 : index
    %c81_271 = arith.constant 81 : index
    %658 = vector.load %arg5[%c1_269, %c0_270, %c81_271] : memref<2x1x358xf32, #tpu.memory_space<vmem>>, vector<1x1x256xf32>
    %659 = vector.shape_cast %658 : vector<1x1x256xf32> to vector<1x256xf32>
    %660 = vector.broadcast %657 : f32 to vector<1x256xf32>
    %661 = arith.mulf %659, %660 : vector<1x256xf32>
    %662 = arith.mulf %661, %44 : vector<1x256xf32>
    %663 = arith.addf %656, %662 : vector<1x256xf32>
    %c86_272 = arith.constant 86 : index
    %664 = memref.load %arg2[%c86_272] : memref<98xf32, #tpu.memory_space<smem>>
    %c1_273 = arith.constant 1 : index
    %c0_274 = arith.constant 0 : index
    %c82_275 = arith.constant 82 : index
    %665 = vector.load %arg5[%c1_273, %c0_274, %c82_275] : memref<2x1x358xf32, #tpu.memory_space<vmem>>, vector<1x1x256xf32>
    %666 = vector.shape_cast %665 : vector<1x1x256xf32> to vector<1x256xf32>
    %667 = vector.broadcast %664 : f32 to vector<1x256xf32>
    %668 = arith.mulf %666, %667 : vector<1x256xf32>
    %669 = arith.mulf %668, %51 : vector<1x256xf32>
    %670 = arith.addf %663, %669 : vector<1x256xf32>
    %c87 = arith.constant 87 : index
    %671 = memref.load %arg2[%c87] : memref<98xf32, #tpu.memory_space<smem>>
    %c1_276 = arith.constant 1 : index
    %c0_277 = arith.constant 0 : index
    %c83_278 = arith.constant 83 : index
    %672 = vector.load %arg5[%c1_276, %c0_277, %c83_278] : memref<2x1x358xf32, #tpu.memory_space<vmem>>, vector<1x1x256xf32>
    %673 = vector.shape_cast %672 : vector<1x1x256xf32> to vector<1x256xf32>
    %674 = vector.broadcast %671 : f32 to vector<1x256xf32>
    %675 = arith.mulf %673, %674 : vector<1x256xf32>
    %676 = arith.addf %670, %675 : vector<1x256xf32>
    %c88 = arith.constant 88 : index
    %677 = memref.load %arg2[%c88] : memref<98xf32, #tpu.memory_space<smem>>
    %c1_279 = arith.constant 1 : index
    %c0_280 = arith.constant 0 : index
    %c84_281 = arith.constant 84 : index
    %678 = vector.load %arg5[%c1_279, %c0_280, %c84_281] : memref<2x1x358xf32, #tpu.memory_space<vmem>>, vector<1x1x256xf32>
    %679 = vector.shape_cast %678 : vector<1x1x256xf32> to vector<1x256xf32>
    %680 = vector.broadcast %677 : f32 to vector<1x256xf32>
    %681 = arith.mulf %679, %680 : vector<1x256xf32>
    %682 = arith.mulf %681, %58 : vector<1x256xf32>
    %683 = arith.addf %676, %682 : vector<1x256xf32>
    %c89 = arith.constant 89 : index
    %684 = memref.load %arg2[%c89] : memref<98xf32, #tpu.memory_space<smem>>
    %c1_282 = arith.constant 1 : index
    %c0_283 = arith.constant 0 : index
    %c85_284 = arith.constant 85 : index
    %685 = vector.load %arg5[%c1_282, %c0_283, %c85_284] : memref<2x1x358xf32, #tpu.memory_space<vmem>>, vector<1x1x256xf32>
    %686 = vector.shape_cast %685 : vector<1x1x256xf32> to vector<1x256xf32>
    %687 = vector.broadcast %684 : f32 to vector<1x256xf32>
    %688 = arith.mulf %686, %687 : vector<1x256xf32>
    %689 = arith.mulf %688, %65 : vector<1x256xf32>
    %690 = arith.addf %683, %689 : vector<1x256xf32>
    %c90 = arith.constant 90 : index
    %691 = memref.load %arg2[%c90] : memref<98xf32, #tpu.memory_space<smem>>
    %c1_285 = arith.constant 1 : index
    %c0_286 = arith.constant 0 : index
    %c86_287 = arith.constant 86 : index
    %692 = vector.load %arg5[%c1_285, %c0_286, %c86_287] : memref<2x1x358xf32, #tpu.memory_space<vmem>>, vector<1x1x256xf32>
    %693 = vector.shape_cast %692 : vector<1x1x256xf32> to vector<1x256xf32>
    %694 = vector.broadcast %691 : f32 to vector<1x256xf32>
    %695 = arith.mulf %693, %694 : vector<1x256xf32>
    %696 = arith.mulf %695, %72 : vector<1x256xf32>
    %697 = arith.addf %690, %696 : vector<1x256xf32>
    %c91 = arith.constant 91 : index
    %698 = memref.load %arg2[%c91] : memref<98xf32, #tpu.memory_space<smem>>
    %c1_288 = arith.constant 1 : index
    %c0_289 = arith.constant 0 : index
    %c96_290 = arith.constant 96 : index
    %699 = vector.load %arg5[%c1_288, %c0_289, %c96_290] : memref<2x1x358xf32, #tpu.memory_space<vmem>>, vector<1x1x256xf32>
    %700 = vector.shape_cast %699 : vector<1x1x256xf32> to vector<1x256xf32>
    %701 = vector.broadcast %698 : f32 to vector<1x256xf32>
    %702 = arith.mulf %700, %701 : vector<1x256xf32>
    %703 = arith.mulf %702, %37 : vector<1x256xf32>
    %704 = arith.addf %697, %703 : vector<1x256xf32>
    %c92 = arith.constant 92 : index
    %705 = memref.load %arg2[%c92] : memref<98xf32, #tpu.memory_space<smem>>
    %c1_291 = arith.constant 1 : index
    %c0_292 = arith.constant 0 : index
    %c97_293 = arith.constant 97 : index
    %706 = vector.load %arg5[%c1_291, %c0_292, %c97_293] : memref<2x1x358xf32, #tpu.memory_space<vmem>>, vector<1x1x256xf32>
    %707 = vector.shape_cast %706 : vector<1x1x256xf32> to vector<1x256xf32>
    %708 = vector.broadcast %705 : f32 to vector<1x256xf32>
    %709 = arith.mulf %707, %708 : vector<1x256xf32>
    %710 = arith.mulf %709, %44 : vector<1x256xf32>
    %711 = arith.addf %704, %710 : vector<1x256xf32>
    %c93 = arith.constant 93 : index
    %712 = memref.load %arg2[%c93] : memref<98xf32, #tpu.memory_space<smem>>
    %c1_294 = arith.constant 1 : index
    %c0_295 = arith.constant 0 : index
    %c98_296 = arith.constant 98 : index
    %713 = vector.load %arg5[%c1_294, %c0_295, %c98_296] : memref<2x1x358xf32, #tpu.memory_space<vmem>>, vector<1x1x256xf32>
    %714 = vector.shape_cast %713 : vector<1x1x256xf32> to vector<1x256xf32>
    %715 = vector.broadcast %712 : f32 to vector<1x256xf32>
    %716 = arith.mulf %714, %715 : vector<1x256xf32>
    %717 = arith.mulf %716, %51 : vector<1x256xf32>
    %718 = arith.addf %711, %717 : vector<1x256xf32>
    %c94 = arith.constant 94 : index
    %719 = memref.load %arg2[%c94] : memref<98xf32, #tpu.memory_space<smem>>
    %c1_297 = arith.constant 1 : index
    %c0_298 = arith.constant 0 : index
    %c99_299 = arith.constant 99 : index
    %720 = vector.load %arg5[%c1_297, %c0_298, %c99_299] : memref<2x1x358xf32, #tpu.memory_space<vmem>>, vector<1x1x256xf32>
    %721 = vector.shape_cast %720 : vector<1x1x256xf32> to vector<1x256xf32>
    %722 = vector.broadcast %719 : f32 to vector<1x256xf32>
    %723 = arith.mulf %721, %722 : vector<1x256xf32>
    %724 = arith.addf %718, %723 : vector<1x256xf32>
    %c95 = arith.constant 95 : index
    %725 = memref.load %arg2[%c95] : memref<98xf32, #tpu.memory_space<smem>>
    %c1_300 = arith.constant 1 : index
    %c0_301 = arith.constant 0 : index
    %c100_302 = arith.constant 100 : index
    %726 = vector.load %arg5[%c1_300, %c0_301, %c100_302] : memref<2x1x358xf32, #tpu.memory_space<vmem>>, vector<1x1x256xf32>
    %727 = vector.shape_cast %726 : vector<1x1x256xf32> to vector<1x256xf32>
    %728 = vector.broadcast %725 : f32 to vector<1x256xf32>
    %729 = arith.mulf %727, %728 : vector<1x256xf32>
    %730 = arith.mulf %729, %58 : vector<1x256xf32>
    %731 = arith.addf %724, %730 : vector<1x256xf32>
    %c96_303 = arith.constant 96 : index
    %732 = memref.load %arg2[%c96_303] : memref<98xf32, #tpu.memory_space<smem>>
    %c1_304 = arith.constant 1 : index
    %c0_305 = arith.constant 0 : index
    %c101_306 = arith.constant 101 : index
    %733 = vector.load %arg5[%c1_304, %c0_305, %c101_306] : memref<2x1x358xf32, #tpu.memory_space<vmem>>, vector<1x1x256xf32>
    %734 = vector.shape_cast %733 : vector<1x1x256xf32> to vector<1x256xf32>
    %735 = vector.broadcast %732 : f32 to vector<1x256xf32>
    %736 = arith.mulf %734, %735 : vector<1x256xf32>
    %737 = arith.mulf %736, %65 : vector<1x256xf32>
    %738 = arith.addf %731, %737 : vector<1x256xf32>
    %c97_307 = arith.constant 97 : index
    %739 = memref.load %arg2[%c97_307] : memref<98xf32, #tpu.memory_space<smem>>
    %c1_308 = arith.constant 1 : index
    %c0_309 = arith.constant 0 : index
    %c102_310 = arith.constant 102 : index
    %740 = vector.load %arg5[%c1_308, %c0_309, %c102_310] : memref<2x1x358xf32, #tpu.memory_space<vmem>>, vector<1x1x256xf32>
    %741 = vector.shape_cast %740 : vector<1x1x256xf32> to vector<1x256xf32>
    %742 = vector.broadcast %739 : f32 to vector<1x256xf32>
    %743 = arith.mulf %741, %742 : vector<1x256xf32>
    %744 = arith.mulf %743, %72 : vector<1x256xf32>
    %745 = arith.addf %738, %744 : vector<1x256xf32>
    %c0_311 = arith.constant 0 : index
    %746 = memref.load %arg3[%c0_311] : memref<1xf32, #tpu.memory_space<smem>>
    %747 = vector.broadcast %746 : f32 to vector<1x256xf32>
    %748 = arith.addf %745, %747 : vector<1x256xf32>
    %749 = arith.negf %748 : vector<1x256xf32>
    %750 = math.exp %749 : vector<1x256xf32>
    %cst_312 = arith.constant 1.000000e+00 : f32
    %751 = vector.broadcast %cst_312 : f32 to vector<1x256xf32>
    %752 = arith.addf %751, %750 : vector<1x256xf32>
    %753 = arith.divf %751, %752 : vector<1x256xf32>
    %c0_313 = arith.constant 0 : index
    %c0_314 = arith.constant 0 : index
    %c0_315 = arith.constant 0 : index
    %754 = vector.load %arg1[%c0_313, %c0_314, %c0_315] : memref<1x4x256xf32, #tpu.memory_space<vmem>>, vector<1x4x256xf32>
    %755 = vector.shape_cast %753 : vector<1x256xf32> to vector<1x1x256xf32>
    %756 = vector.broadcast %755 : vector<1x1x256xf32> to vector<1x4x256xf32>
    %757 = arith.mulf %754, %756 : vector<1x4x256xf32>
    %c0_316 = arith.constant 0 : index
    %c0_317 = arith.constant 0 : index
    %c0_318 = arith.constant 0 : index
    %758 = vector.load %arg4[%c0_316, %c0_317, %c0_318] : memref<1x4x256xf32, #tpu.memory_space<vmem>>, vector<1x4x256xf32>
    tpu.vector_store %arg4[%c0_316, %c0_317, %c0_318], %757 {strides = array<i32>} : memref<1x4x256xf32, #tpu.memory_space<vmem>>, vector<1x4x256xf32>,
    return
  }
  func.func @transform_0(%arg0: i32) -> (i32, i32, i32) {
    %c0_i32 = arith.constant 0 : i32
    %c0_i32_0 = arith.constant 0 : i32
    %c0_i32_1 = arith.constant 0 : i32
    return %arg0, %c0_i32, %c0_i32_0 : i32, i32, i32
  }
  func.func @transform_1(%arg0: i32) -> i32 {
    %c0_i32 = arith.constant 0 : i32
    %c0_i32_0 = arith.constant 0 : i32
    return %c0_i32 : i32
  }
  func.func @transform_2(%arg0: i32) -> i32 {
    %c0_i32 = arith.constant 0 : i32
    %c0_i32_0 = arith.constant 0 : i32
    return %c0_i32 : i32
  }
  func.func @transform_3(%arg0: i32) -> (i32, i32, i32) {
    %c0_i32 = arith.constant 0 : i32
    %c0_i32_0 = arith.constant 0 : i32
    %c0_i32_1 = arith.constant 0 : i32
    return %arg0, %c0_i32, %c0_i32_0 : i32, i32, i32
  }
}

</mosaic_0001>

<llo_original>
// kernel: tpu_custom_call.1
$region0: #{tpu_custom_call.1}
  #allocation0 [shape = 'u32[]', space=smem, size = 0x4, offset = 0x4, fixed_abs, tag = 'smem constant byte address 0x4 - core index']
  #allocation1 [shape = 'u32[144,128]{1,0:T(1,128)}', space=vmem, size = 0x12000, scoped, tag = 'internal scratch']
  #allocation2 [shape = 'f32[2,1,358]{2,1,0:T(1,128)}', space=vmem, size = 0xc00, scoped, tag = 'scratch operand']
  #allocation3 [shape = 'f32[1]{0:T(128)S(6)}', space=smem, size = 0x200, scoped, tag = 'scoped memory for tpu_custom_call.1']
  %s0 = inlined_call_operand.hbm [shape: f32[2,4,256], index: 0, kind: input, shape index: {}]
  %s1 = inlined_call_operand.vmem [shape: f32[98], index: 1, kind: input, shape index: {}]
  %s2 = inlined_call_operand.<no memory space> [shape: f32[1], index: 2, kind: input, shape index: {}]
  %s3 = inlined_call_operand.hbm [shape: f32[2,4,256], index: 3, kind: output, shape index: {}]
  %s4 = sld [smem:[#allocation0]]
  $region53: #{tpu_custom_call.1} parent=0
    _
  %s6 = ssub.s32 1, %s4
  %s7 = scalar_select 0, %s6, %s4
  %8 = sst [smem:[#allocation3]] %s2
  $region1: #{tpu_custom_call.1} parent=0
    #allocation4 [shape = 'u8[8192]{0}', space=vmem, size = 0x2000, scoped, tag = 'input window, operand 0']
    #allocation5 [shape = 's32[2]{0}', space=sflag, size = 0x8, scoped, tag = 'scoped memory for tpu_custom_call.1']
    #allocation6 [shape = 's32[2]{0}', space=sflag, size = 0x8, scoped, tag = 'scoped memory for tpu_custom_call.1']
    #allocation7 [shape = 's32[2]{0}', space=sflag, size = 0x8, scoped, tag = 'scoped memory for tpu_custom_call.1']
    #allocation8 [shape = 'u8[512]{0}', space=smem, size = 0x200, scoped, tag = 'input window, operand 1, single buffered']
    #allocation9 [shape = 'u8[8192]{0}', space=vmem, size = 0x2000, scoped, tag = 'output window, operand 0']
    %9 = vsyncpa [#allocation5], 0
    %s10 = scalar_lea.sflag [#allocation5], 1
    %11 = vsyncpa %s10, 0
    %12 = vsyncpa [#allocation7], 0
    %13 = vsyncpa [#allocation6], 0
    %s14 = scalar_lea.sflag [#allocation6], 1
    %15 = vsyncpa %s14, 0
    loop: start=0, step=1, limit=4
    $region2: #{tpu_custom_call.1} parent=1 // loop_pre_header
      _
    $region3: #{tpu_custom_call.1} parent=1 // loop_header
      %s17 = sphi 0, %s21
      %p18 = scmp.ge.s32.totalorder %s17, 4
      %s27 = sphi 0, %s29
      %s30 = sphi 0, %s27
      %s31 = sphi 0, %s30
      %s47 = sphi 0, %s31
      %s51 = sphi 0, %s51
      %s53 = sphi 0, %s51
      %s54 = sphi 0, %s53
      %s68 = sphi 0, %s54
      %s72 = sphi 0, %s72
      %s74 = sphi 0, %s72
      %s75 = sphi 0, %s74
      %s89 = sphi 0, %s75
      %s95 = sphi 0, %s97
      %s98 = sphi 0, %s95
      %s99 = sphi 0, %s98
      %s115 = sphi 0, %s99
    $region4: #{tpu_custom_call.1} parent=1 // loop_header_branch
      %20 = sbr.rel (%p18) target = $region8
    $region5: #{tpu_custom_call.1} parent=1 // loop_body
      %s22 = ssub.s32 %s17, 1
      %s23 = ssub.s32 %s17, 2
      %s24 = sadd.s32 %s17, 1
      %s25 = ssub.s32 %s17, %s24
      %p26 = scmp.eq.s32.totalorder %s25, 0
      %s28 = sadd.s32 %s27, 1
      %s29 = scalar_select %p26, %s27, %s28
      %p32 = pneg %p26
      %p33 = scmp.eq.s32.totalorder %s17, 1
      %p34 = por %p32, %p33
      %p35 = scmp.ne.s32.totalorder %s27, %s30
      %p36 = scmp.eq.s32.totalorder %s17, 0
      %p37 = por %p35, %p36
      %p38 = scmp.ne.s32.totalorder %s27, %s30
      %p39 = scmp.eq.s32.totalorder %s22, 1
      %p40 = por %p38, %p39
      %p41 = scmp.ne.s32.totalorder %s30, %s31
      %p42 = scmp.eq.s32.totalorder %s22, 0
      %p43 = por %p41, %p42
      %p44 = scmp.ne.s32.totalorder %s30, %s31
      %p45 = scmp.eq.s32.totalorder %s23, 1
      %p46 = por %p44, %p45
      %p48 = scmp.ne.s32.totalorder %s31, %s47
      %p49 = scmp.eq.s32.totalorder %s23, 0
      %p50 = por %p48, %p49
      %s52 = sadd.s32 %s51, 1
      %p55 = scmp.eq.s32.totalorder %s17, 1
      %p56 = scmp.ne.s32.totalorder %s51, %s53
      %p57 = scmp.eq.s32.totalorder %s17, 0
      %p58 = por %p56, %p57
      %p59 = scmp.ne.s32.totalorder %s51, %s53
      %p60 = scmp.eq.s32.totalorder %s22, 1
      %p61 = por %p59, %p60
      %p62 = scmp.ne.s32.totalorder %s53, %s54
      %p63 = scmp.eq.s32.totalorder %s22, 0
      %p64 = por %p62, %p63
      %p65 = scmp.ne.s32.totalorder %s53, %s54
      %p66 = scmp.eq.s32.totalorder %s23, 1
      %p67 = por %p65, %p66
      %p69 = scmp.ne.s32.totalorder %s54, %s68
      %p70 = scmp.eq.s32.totalorder %s23, 0
      %p71 = por %p69, %p70
      %s73 = sadd.s32 %s72, 1
      %p76 = scmp.eq.s32.totalorder %s17, 1
      %p77 = scmp.ne.s32.totalorder %s72, %s74
      %p78 = scmp.eq.s32.totalorder %s17, 0
      %p79 = por %p77, %p78
      %p80 = scmp.ne.s32.totalorder %s72, %s74
      %p81 = scmp.eq.s32.totalorder %s22, 1
      %p82 = por %p80, %p81
      %p83 = scmp.ne.s32.totalorder %s74, %s75
      %p84 = scmp.eq.s32.totalorder %s22, 0
      %p85 = por %p83, %p84
      %p86 = scmp.ne.s32.totalorder %s74, %s75
      %p87 = scmp.eq.s32.totalorder %s23, 1
      %p88 = por %p86, %p87
      %p90 = scmp.ne.s32.totalorder %s75, %s89
      %p91 = scmp.eq.s32.totalorder %s23, 0
      %p92 = por %p90, %p91
      %s93 = ssub.s32 %s17, %s24
      %p94 = scmp.eq.s32.totalorder %s93, 0
      %s96 = sadd.s32 %s95, 1
      %s97 = scalar_select %p94, %s95, %s96
      %p100 = pneg %p94
      %p101 = scmp.eq.s32.totalorder %s17, 1
      %p102 = por %p100, %p101
      %p103 = scmp.ne.s32.totalorder %s95, %s98
      %p104 = scmp.eq.s32.totalorder %s17, 0
      %p105 = por %p103, %p104
      %p106 = scmp.ne.s32.totalorder %s95, %s98
      %p107 = scmp.eq.s32.totalorder %s22, 1
      %p108 = por %p106, %p107
      %p109 = scmp.ne.s32.totalorder %s98, %s99
      %p110 = scmp.eq.s32.totalorder %s22, 0
      %p111 = por %p109, %p110
      %p112 = scmp.ne.s32.totalorder %s98, %s99
      %p113 = scmp.eq.s32.totalorder %s23, 1
      %p114 = por %p112, %p113
      %p116 = scmp.ne.s32.totalorder %s99, %s115
      %p117 = scmp.eq.s32.totalorder %s23, 0
      %p118 = por %p116, %p117
      %p119 = scmp.le.s32.totalorder 1, %s17
      %p120 = scmp.lt.s32.totalorder %s17, 3
      %p121 = pnand %p119, %p120
      %p122 = pneg %p121
      // Predicated region
      $region9: #{tpu_custom_call.1} parent=5 // pred_check
        _
      $region10: #{tpu_custom_call.1} parent=5 // pred_check_branch
        %124 = sbr.rel (%p121) target = $region12
      $region11: #{tpu_custom_call.1} parent=5 // pred_region
        %s125 = ssub.s32 %s17, 1
        // Predicated region
        $region13: #{tpu_custom_call.1} parent=11 // pred_check
          %p126 = pneg %p64
        $region14: #{tpu_custom_call.1} parent=11 // pred_check_branch
          %128 = sbr.rel (%p126) target = $region16
        $region15: #{tpu_custom_call.1} parent=11 // pred_region
          %s130 = ssub.s32 16, 16
          %131 = vsyncadd [#allocation7], %s130
          %s133 = sshll.u32 %s1, 4
          %s134 = int_to_ptr.vmem [resolvable:$true] %s133
          %136 = dma.vmem_to_smem %s134, 16, [#allocation8], [#allocation7]
        $region16: #{tpu_custom_call.1} parent=11 // pred_fallthru
          _
        // Predicated region
        $region17: #{tpu_custom_call.1} parent=11 // pred_check
          %p137 = pneg %p85
        $region18: #{tpu_custom_call.1} parent=11 // pred_check_branch
          %139 = sbr.rel (%p137) target = $region20
        $region19: #{tpu_custom_call.1} parent=11 // pred_region
          _
        $region20: #{tpu_custom_call.1} parent=11 // pred_fallthru
          _
      $region12: #{tpu_custom_call.1} parent=5 // pred_fallthru
        _
      %p140 = scmp.lt.s32.totalorder %s17, 2
      // Predicated region
      $region21: #{tpu_custom_call.1} parent=5 // pred_check
        %p141 = pneg %p140
      $region22: #{tpu_custom_call.1} parent=5 // pred_check_branch
        %143 = sbr.rel (%p141) target = $region24
      $region23: #{tpu_custom_call.1} parent=5 // pred_region
        // Predicated region
        $region25: #{tpu_custom_call.1} parent=23 // pred_check
          %p144 = pneg %p37
        $region26: #{tpu_custom_call.1} parent=23 // pred_check_branch
          %146 = sbr.rel (%p144) target = $region28
        $region27: #{tpu_custom_call.1} parent=23 // pred_region
          %s147 = sand.u32 %s27, 1
          %s148 = scalar_lea.sflag [#allocation5], %s147
          %s149 = sand.u32 %s27, 1
          %s150 = smul.addr %s149, 8
          %s151 = scalar_lea.vmem [#allocation4], %s150
          %s153 = ssub.s32 128, 128
          %154 = vsyncadd %s148, %s153
          %s155 = smul.addr %s17, 2
          %s156 = smul.addr %s155, 64
          %s157 = scalar_lea.hbm %s0, %s156
          %s159 = sshll.u32 %s151, 4
          %s160 = int_to_ptr.vmem [resolvable:$true] %s159
          %162 = dma.hbm_to_vmem [thread:$0]  %s157, 128, %s160, %s148
        $region28: #{tpu_custom_call.1} parent=23 // pred_fallthru
          _
      $region24: #{tpu_custom_call.1} parent=5 // pred_fallthru
        _
      %p163 = scmp.le.s32.totalorder 1, %s17
      %p164 = scmp.lt.s32.totalorder %s17, 3
      %p165 = pnand %p163, %p164
      %p166 = pneg %p165
      // Predicated region
      $region29: #{tpu_custom_call.1} parent=5 // pred_check
        _
      $region30: #{tpu_custom_call.1} parent=5 // pred_check_branch
        %168 = sbr.rel (%p165) target = $region32
      $region31: #{tpu_custom_call.1} parent=5 // pred_region
        %s169 = ssub.s32 %s17, 1
        %s170 = sand.u32 %s30, 1
        %s171 = scalar_lea.sflag [#allocation5], %s170
        %s172 = sand.u32 %s30, 1
        %s173 = smul.addr %s172, 8
        %s174 = scalar_lea.vmem [#allocation4], %s173
        // Predicated region
        $region33: #{tpu_custom_call.1} parent=31 // pred_check
          %p175 = pneg %p43
        $region34: #{tpu_custom_call.1} parent=31 // pred_check_branch
          %177 = sbr.rel (%p175) target = $region36
        $region35: #{tpu_custom_call.1} parent=31 // pred_region
          %178 = dma.done %s171, 128
        $region36: #{tpu_custom_call.1} parent=31 // pred_fallthru
          _
        // Predicated region
        $region37: #{tpu_custom_call.1} parent=31 // pred_check
          %p179 = pneg %p64
        $region38: #{tpu_custom_call.1} parent=31 // pred_check_branch
          %181 = sbr.rel (%p179) target = $region40
        $region39: #{tpu_custom_call.1} parent=31 // pred_region
          %182 = dma.done [#allocation7], 16
        $region40: #{tpu_custom_call.1} parent=31 // pred_fallthru
          _
        %183 = sfence
        %s184 = sand.u32 %s30, 1
        %s185 = scalar_lea.sflag [#allocation5], %s184
        %s186 = sand.u32 %s30, 1
        %s187 = smul.addr %s186, 8
        %s188 = scalar_lea.vmem [#allocation4], %s187
        %p189 = pneg %p43
        %p190 = pneg %p40
        %p191 = pneg %p64
        %p192 = pneg %p61
        %p193 = pneg %p85
        %p194 = pneg %p82
        %p195 = pneg %p111
        %p196 = pneg %p108
        %s197 = sand.u32 %s98, 1
        %s198 = scalar_lea.sflag [#allocation6], %s197
        %s199 = sand.u32 %s98, 1
        %s200 = smul.addr %s199, 8
        %s201 = scalar_lea.vmem [#allocation9], %s200
        %v202 = vld [vmem:[%s174] sm:$0xff]
        %v204 = vcombine.high %v202, %v202
        %vm206 = vcmask 1043456
        %v207 = vsel %vm206, %v202, -inf
        %v208 = vrot.slane %v207, 4
        %v209 = vmax.f32 %v207, %v208
        %v210 = vrot.slane %v209, 2
        %v211 = vmax.f32 %v209, %v210
        %v212 = vrot.slane %v211, 1
        %v213 = vmax.f32 %v211, %v212
        %v214 = vsel %vm206, %v204, -inf
        %v215 = vrot.slane %v214, 4
        %v216 = vmax.f32 %v214, %v215
        %v217 = vrot.slane %v216, 2
        %v218 = vmax.f32 %v216, %v217
        %v219 = vrot.slane %v218, 1
        %v220 = vmax.f32 %v218, %v219
        %v221 = vsel %vm206, %v202, 0.0
        %v222 = vrot.slane %v221, 4
        %v223 = vadd.f32 %v221, %v222
        %v224 = vrot.slane %v223, 2
        %v225 = vadd.f32 %v223, %v224
        %v226 = vrot.slane %v225, 1
        %v227 = vadd.f32 %v225, %v226
        %v228 = vsel %vm206, %v204, 0.0
        %v229 = vrot.slane %v228, 4
        %v230 = vadd.f32 %v228, %v229
        %v231 = vrot.slane %v230, 2
        %v232 = vadd.f32 %v230, %v231
        %v233 = vrot.slane %v232, 1
        %v234 = vadd.f32 %v232, %v233
        %v235 = vrcp.pop 4.0
        %v236 = vmul.f32 %v227, %v235
        %v237 = vmul.f32 %v234, %v235
        %v238 = vlaneseq
        %vm239 = vcmp.ge.s32.totalorder %v238, 0
        %vm240 = vcmp.lt.s32.totalorder %v238, 51
        %vm241 = vmand %vm239, %vm240
        %242 = vst.msk [vmem:[#allocation2] sm:$0x1] %vm241, 0.0
        %243 = vst.msk [vmem:[#allocation2 + $0x3] sm:$0x1] %vm241, 0.0
        %vm244 = vcmp.ge.s32.totalorder %v238, 51
        %vm245 = vcmp.lt.s32.totalorder %v238, 102
        %vm246 = vmand %vm244, %vm245
        %247 = vst.msk [vmem:[#allocation2 + $0x2] sm:$0x1] %vm246, 0.0
        %248 = vst.msk [vmem:[#allocation2 + $0x5] sm:$0x1] %vm246, 0.0
        %v251 = vcombine.low %v213, %v220
        %v253 = vunpack.c.l.s4 1966171168
        %v254 = vunpack.c.0.s8 %v253
        %v255 = vlaneseq
        %v256 = vshrl.u32 %v255, 7
        %v257 = vsub.s32 %v254, %v256
        %v258 = vrot.slane %v251, %v257
        %v260 = vunpack.c.l.s4 1966171168
        %v261 = vunpack.c.0.s8 %v260
        %v262 = vlaneseq
        %v263 = vshrl.u32 %v262, 7
        %v264 = vsub.s32 %v261, %v263
        %v265 = vrot.slane %v258, %v264
        %266 = vrot.lane.b32.xlu0 %v265, 51
        %v267 = vpop.permute.xlu0 %266
        %v268 = vrot.slane %v267, 7
        %vm269 = vcmask 416768
        %v270 = vsel %vm269, %v268, %v267
        %vm272 = vcmp.lt.s32.totalorder %v238, 307
        %vm273 = vmand %vm244, %vm272
        %274 = vst.msk [vmem:[#allocation2] sm:$0x7] %vm273, %v270
        %v277 = vcombine.low %v236, %v237
        %v279 = vunpack.c.l.s4 1966171168
        %v280 = vunpack.c.0.s8 %v279
        %v281 = vlaneseq
        %v282 = vshrl.u32 %v281, 7
        %v283 = vsub.s32 %v280, %v282
        %v284 = vrot.slane %v277, %v283
        %v286 = vunpack.c.l.s4 1966171168
        %v287 = vunpack.c.0.s8 %v286
        %v288 = vlaneseq
        %v289 = vshrl.u32 %v288, 7
        %v290 = vsub.s32 %v287, %v289
        %v291 = vrot.slane %v284, %v290
        %292 = vrot.lane.b32.xlu0 %v291, 51
        %v293 = vpop.permute.xlu0 %292
        %v294 = vrot.slane %v293, 7
        %v295 = vsel %vm269, %v294, %v293
        %s297 = scalar_lea.vmem [#allocation2], 3
        %298 = vst.msk [vmem:[%s297] sm:$0x7] %vm273, %v295
        %v299 = vlaneseq
        %v300 = vand.u32 %v299, 127
        %v301 = vadd.s32 %v300, 128
        %vm302 = vcmp.lt.s32.totalorder %v300, 0
        %v303 = vsub.s32 0, %v300
        %v304 = vsel %vm302, %v303, %v300
        %v305 = vshrl.u32 %v304, 4
        %v306 = vand.u32 %v304, 15
        %v307 = vsub.s32 0, %v306
        %v308 = vsel %vm302, %v307, %v306
        %vm309 = vcmp.lt.s32.totalorder %v301, 0
        %v310 = vsub.s32 0, %v301
        %v311 = vsel %vm309, %v310, %v301
        %v312 = vshrl.u32 %v311, 4
        %v313 = vand.u32 %v311, 15
        %v314 = vsub.s32 0, %v313
        %v315 = vsel %vm309, %v314, %v313
        %vm316 = vcmp.ne.s32.totalorder %v308, 0
        %vm317 = vcmp.ne.s32.totalorder %v315, 0
        %vm318 = vcmp.lt.s32.totalorder %v308, 0
        %vm319 = vcmp.lt.s32.totalorder %v315, 0
        %vm320 = vmand %vm318, %vm316
        %vm321 = vmand %vm319, %vm317
        %v322 = vadd.s32 %v308, 16
        %v323 = vadd.s32 %v315, 16
        %v324 = vsel %vm320, %v322, %v308
        %v325 = vsel %vm321, %v323, %v315
        %vm326 = vcmp.ge.s32.totalorder %v324, 3
        %vm327 = vcmp.ge.s32.totalorder %v325, 3
        %vm328 = vcmp.lt.s32.totalorder %v324, 19
        %vm329 = vcmp.lt.s32.totalorder %v325, 19
        %vm330 = vmand %vm326, %vm328
        %vm331 = vmand %vm327, %vm329
        %v332 = vsel %vm330, 1, 0
        %v333 = vsel %vm331, 1, 0
        %v334 = vcvt.s32.f32 %v332
        %v335 = vcvt.s32.f32 %v333
        %vm336 = vcmp.ge.s32.totalorder %v324, 2
        %vm337 = vcmp.ge.s32.totalorder %v325, 2
        %vm338 = vcmp.lt.s32.totalorder %v324, 18
        %vm339 = vcmp.lt.s32.totalorder %v325, 18
        %vm340 = vmand %vm336, %vm338
        %vm341 = vmand %vm337, %vm339
        %v342 = vsel %vm340, 1, 0
        %v343 = vsel %vm341, 1, 0
        %v344 = vcvt.s32.f32 %v342
        %v345 = vcvt.s32.f32 %v343
        %vm346 = vcmp.ge.s32.totalorder %v324, 1
        %vm347 = vcmp.ge.s32.totalorder %v325, 1
        %vm348 = vcmp.lt.s32.totalorder %v324, 17
        %vm349 = vcmp.lt.s32.totalorder %v325, 17
        %vm350 = vmand %vm346, %vm348
        %vm351 = vmand %vm347, %vm349
        %v352 = vsel %vm350, 1, 0
        %v353 = vsel %vm351, 1, 0
        %v354 = vcvt.s32.f32 %v352
        %v355 = vcvt.s32.f32 %v353
        %vm356 = vcmp.ge.s32.totalorder %v324, 4294967295
        %vm357 = vcmp.ge.s32.totalorder %v325, 4294967295
        %vm358 = vcmp.lt.s32.totalorder %v324, 15
        %vm359 = vcmp.lt.s32.totalorder %v325, 15
        %vm360 = vmand %vm356, %vm358
        %vm361 = vmand %vm357, %vm359
        %v362 = vsel %vm360, 1, 0
        %v363 = vsel %vm361, 1, 0
        %v364 = vcvt.s32.f32 %v362
        %v365 = vcvt.s32.f32 %v363
        %vm366 = vcmp.ge.s32.totalorder %v324, 4294967294
        %vm367 = vcmp.ge.s32.totalorder %v325, 4294967294
        %vm368 = vcmp.lt.s32.totalorder %v324, 14
        %vm369 = vcmp.lt.s32.totalorder %v325, 14
        %vm370 = vmand %vm366, %vm368
        %vm371 = vmand %vm367, %vm369
        %v372 = vsel %vm370, 1, 0
        %v373 = vsel %vm371, 1, 0
        %v374 = vcvt.s32.f32 %v372
        %v375 = vcvt.s32.f32 %v373
        %vm376 = vcmp.ge.s32.totalorder %v324, 4294967293
        %vm377 = vcmp.ge.s32.totalorder %v325, 4294967293
        %vm378 = vcmp.lt.s32.totalorder %v324, 13
        %vm379 = vcmp.lt.s32.totalorder %v325, 13
        %vm380 = vmand %vm376, %vm378
        %vm381 = vmand %vm377, %vm379
        %v382 = vsel %vm380, 1, 0
        %v383 = vsel %vm381, 1, 0
        %v384 = vcvt.s32.f32 %v382
        %v385 = vcvt.s32.f32 %v383
        %s386 = sld [smem:[#allocation8]]
        %v387 = vld [vmem:[#allocation2] sm:$0x3]
        %v388 = vstv %s386
        %v389 = vmul.f32 %v387, %v388
        %v392 = vcombine.low %v334, %v335
        %v394 = vunpack.c.l.s4 1966171168
        %v395 = vunpack.c.0.s8 %v394
        %v396 = vlaneseq
        %v397 = vshrl.u32 %v396, 7
        %v398 = vsub.s32 %v395, %v397
        %v399 = vrot.slane %v392, %v398
        %v401 = vunpack.c.l.s4 1966171168
        %v402 = vunpack.c.0.s8 %v401
        %v403 = vlaneseq
        %v404 = vshrl.u32 %v403, 7
        %v405 = vsub.s32 %v402, %v404
        %v406 = vrot.slane %v399, %v405
        %v408 = vmul.f32 %v389, %v406
        %v409 = vadd.f32 %v408, 0.0
        %s410 = sld [smem:[#allocation8 + $0x1]]
        %v411 = vld [vmem:[#allocation2] sm:$0x7]
        %v412 = vstv %s410
        %v413 = vmul.f32 %v411, %v412
        %v416 = vcombine.low %v344, %v345
        %v418 = vunpack.c.l.s4 1966171168
        %v419 = vunpack.c.0.s8 %v418
        %v420 = vlaneseq
        %v421 = vshrl.u32 %v420, 7
        %v422 = vsub.s32 %v419, %v421
        %v423 = vrot.slane %v416, %v422
        %v425 = vunpack.c.l.s4 1966171168
        %v426 = vunpack.c.0.s8 %v425
        %v427 = vlaneseq
        %v428 = vshrl.u32 %v427, 7
        %v429 = vsub.s32 %v426, %v428
        %v430 = vrot.slane %v423, %v429
        %431 = vrot.lane.b32.xlu0 %v430, 1
        %v432 = vpop.permute.xlu0 %431
        %v433 = vrot.slane %v432, 7
        %vm434 = vcmask 7168
        %v435 = vsel %vm434, %v433, %v432
        %v437 = vmul.f32 %v413, %v435
        %439 = vrot.lane.b32.xlu0 %v437, 127
        %v440 = vpop.permute.xlu0 %439
        %v441 = vrot.slane %v440, 1
        %vm442 = vcmask 1039360
        %v443 = vsel %vm442, %v440, %v441
        %v445 = vadd.f32 %v409, %v443
        %s446 = sld [smem:[#allocation8 + $0x2]]
        %v447 = vld [vmem:[#allocation2] sm:$0x7]
        %v448 = vstv %s446
        %v449 = vmul.f32 %v447, %v448
        %v452 = vcombine.low %v354, %v355
        %v454 = vunpack.c.l.s4 1966171168
        %v455 = vunpack.c.0.s8 %v454
        %v456 = vlaneseq
        %v457 = vshrl.u32 %v456, 7
        %v458 = vsub.s32 %v455, %v457
        %v459 = vrot.slane %v452, %v458
        %v461 = vunpack.c.l.s4 1966171168
        %v462 = vunpack.c.0.s8 %v461
        %v463 = vlaneseq
        %v464 = vshrl.u32 %v463, 7
        %v465 = vsub.s32 %v462, %v464
        %v466 = vrot.slane %v459, %v465
        %467 = vrot.lane.b32.xlu0 %v466, 2
        %v468 = vpop.permute.xlu0 %467
        %v469 = vrot.slane %v468, 7
        %vm470 = vcmask 15360
        %v471 = vsel %vm470, %v469, %v468
        %v473 = vmul.f32 %v449, %v471
        %475 = vrot.lane.b32.xlu0 %v473, 126
        %v476 = vpop.permute.xlu0 %475
        %v477 = vrot.slane %v476, 1
        %vm478 = vcmask 1031168
        %v479 = vsel %vm478, %v476, %v477
        %v481 = vadd.f32 %v445, %v479
        %s482 = sld [smem:[#allocation8 + $0x3]]
        %v483 = vld [vmem:[#allocation2] sm:$0x7]
        %v484 = vstv %s482
        %v485 = vmul.f32 %v483, %v484
        %487 = vrot.lane.b32.xlu0 %v485, 125
        %v488 = vpop.permute.xlu0 %487
        %v489 = vrot.slane %v488, 1
        %vm490 = vcmask 1022976
        %v491 = vsel %vm490, %v488, %v489
        %v493 = vadd.f32 %v481, %v491
        %s494 = sld [smem:[#allocation8 + $0x4]]
        %v495 = vstv %s494
        %v496 = vmul.f32 %v483, %v495
        %v499 = vcombine.low %v364, %v365
        %v501 = vunpack.c.l.s4 1966171168
        %v502 = vunpack.c.0.s8 %v501
        %v503 = vlaneseq
        %v504 = vshrl.u32 %v503, 7
        %v505 = vsub.s32 %v502, %v504
        %v506 = vrot.slane %v499, %v505
        %v508 = vunpack.c.l.s4 1966171168
        %v509 = vunpack.c.0.s8 %v508
        %v510 = vlaneseq
        %v511 = vshrl.u32 %v510, 7
        %v512 = vsub.s32 %v509, %v511
        %v513 = vrot.slane %v506, %v512
        %514 = vrot.lane.b32.xlu0 %v513, 4
        %v515 = vpop.permute.xlu0 %514
        %v516 = vrot.slane %v515, 7
        %vm517 = vcmask 31744
        %v518 = vsel %vm517, %v516, %v515
        %v520 = vmul.f32 %v496, %v518
        %522 = vrot.lane.b32.xlu0 %v520, 124
        %v523 = vpop.permute.xlu0 %522
        %v524 = vrot.slane %v523, 1
        %vm525 = vcmask 1014784
        %v526 = vsel %vm525, %v523, %v524
        %v528 = vadd.f32 %v493, %v526
        %s529 = sld [smem:[#allocation8 + $0x5]]
        %v530 = vld [vmem:[#allocation2] sm:$0x7]
        %v531 = vstv %s529
        %v532 = vmul.f32 %v530, %v531
        %v535 = vcombine.low %v374, %v375
        %v537 = vunpack.c.l.s4 1966171168
        %v538 = vunpack.c.0.s8 %v537
        %v539 = vlaneseq
        %v540 = vshrl.u32 %v539, 7
        %v541 = vsub.s32 %v538, %v540
        %v542 = vrot.slane %v535, %v541
        %v544 = vunpack.c.l.s4 1966171168
        %v545 = vunpack.c.0.s8 %v544
        %v546 = vlaneseq
        %v547 = vshrl.u32 %v546, 7
        %v548 = vsub.s32 %v545, %v547
        %v549 = vrot.slane %v542, %v548
        %550 = vrot.lane.b32.xlu0 %v549, 5
        %v551 = vpop.permute.xlu0 %550
        %v552 = vrot.slane %v551, 7
        %vm553 = vcmask 39936
        %v554 = vsel %vm553, %v552, %v551
        %v556 = vmul.f32 %v532, %v554
        %558 = vrot.lane.b32.xlu0 %v556, 123
        %v559 = vpop.permute.xlu0 %558
        %v560 = vrot.slane %v559, 1
        %vm561 = vcmask 1006592
        %v562 = vsel %vm561, %v559, %v560
        %v564 = vadd.f32 %v528, %v562
        %s565 = sld [smem:[#allocation8 + $0x6]]
        %v566 = vld [vmem:[#allocation2] sm:$0x7]
        %v567 = vstv %s565
        %v568 = vmul.f32 %v566, %v567
        %v571 = vcombine.low %v384, %v385
        %v573 = vunpack.c.l.s4 1966171168
        %v574 = vunpack.c.0.s8 %v573
        %v575 = vlaneseq
        %v576 = vshrl.u32 %v575, 7
        %v577 = vsub.s32 %v574, %v576
        %v578 = vrot.slane %v571, %v577
        %v580 = vunpack.c.l.s4 1966171168
        %v581 = vunpack.c.0.s8 %v580
        %v582 = vlaneseq
        %v583 = vshrl.u32 %v582, 7
        %v584 = vsub.s32 %v581, %v583
        %v585 = vrot.slane %v578, %v584
        %586 = vrot.lane.b32.xlu0 %v585, 6
        %v587 = vpop.permute.xlu0 %586
        %v588 = vrot.slane %v587, 7
        %vm589 = vcmask 48128
        %v590 = vsel %vm589, %v588, %v587
        %v592 = vmul.f32 %v568, %v590
        %594 = vrot.lane.b32.xlu0 %v592, 122
        %v595 = vpop.permute.xlu0 %594
        %v596 = vrot.slane %v595, 1
        %vm597 = vcmask 998400
        %v598 = vsel %vm597, %v595, %v596
        %v600 = vadd.f32 %v564, %v598
        %s601 = sld [smem:[#allocation8 + $0x7]]
        %v602 = vld [vmem:[#allocation2] sm:$0x7]
        %v603 = vstv %s601
        %v604 = vmul.f32 %v602, %v603
        %605 = vrot.lane.b32.xlu0 %v406, 16
        %v606 = vpop.permute.xlu0 %605
        %v607 = vrot.slane %v606, 7
        %vm608 = vcmask 130048
        %v609 = vsel %vm608, %v607, %v606
        %v611 = vmul.f32 %v604, %v609
        %613 = vrot.lane.b32.xlu0 %v611, 112
        %v614 = vpop.permute.xlu0 %613
        %v615 = vrot.slane %v614, 1
        %vm616 = vcmask 916480
        %v617 = vsel %vm616, %v614, %v615
        %v619 = vadd.f32 %v600, %v617
        %s620 = sld [smem:[#allocation8 + $0x8]]
        %v621 = vld [vmem:[#allocation2] sm:$0x7]
        %v622 = vstv %s620
        %v623 = vmul.f32 %v621, %v622
        %624 = vrot.lane.b32.xlu0 %v430, 17
        %v625 = vpop.permute.xlu0 %624
        %v626 = vrot.slane %v625, 7
        %vm627 = vcmask 138240
        %v628 = vsel %vm627, %v626, %v625
        %v630 = vmul.f32 %v623, %v628
        %632 = vrot.lane.b32.xlu0 %v630, 111
        %v633 = vpop.permute.xlu0 %632
        %v634 = vrot.slane %v633, 1
        %vm635 = vcmask 908288
        %v636 = vsel %vm635, %v633, %v634
        %v638 = vadd.f32 %v619, %v636
        %s639 = sld [smem:[#allocation8 + $0x9]]
        %v640 = vld [vmem:[#allocation2] sm:$0x7]
        %v641 = vstv %s639
        %v642 = vmul.f32 %v640, %v641
        %643 = vrot.lane.b32.xlu0 %v466, 18
        %v644 = vpop.permute.xlu0 %643
        %v645 = vrot.slane %v644, 7
        %vm646 = vcmask 146432
        %v647 = vsel %vm646, %v645, %v644
        %v649 = vmul.f32 %v642, %v647
        %651 = vrot.lane.b32.xlu0 %v649, 110
        %v652 = vpop.permute.xlu0 %651
        %v653 = vrot.slane %v652, 1
        %vm654 = vcmask 900096
        %v655 = vsel %vm654, %v652, %v653
        %v657 = vadd.f32 %v638, %v655
        %s658 = sld [smem:[#allocation8 + $0xa]]
        %v659 = vld [vmem:[#allocation2] sm:$0x7]
        %v660 = vstv %s658
        %v661 = vmul.f32 %v659, %v660
        %663 = vrot.lane.b32.xlu0 %v661, 109
        %v664 = vpop.permute.xlu0 %663
        %v665 = vrot.slane %v664, 1
        %vm666 = vcmask 891904
        %v667 = vsel %vm666, %v664, %v665
        %v669 = vadd.f32 %v657, %v667
        %s670 = sld [smem:[#allocation8 + $0xb]]
        %v671 = vstv %s670
        %v672 = vmul.f32 %v659, %v671
        %673 = vrot.lane.b32.xlu0 %v513, 20
        %v674 = vpop.permute.xlu0 %673
        %v675 = vrot.slane %v674, 7
        %vm676 = vcmask 162816
        %v677 = vsel %vm676, %v675, %v674
        %v679 = vmul.f32 %v672, %v677
        %681 = vrot.lane.b32.xlu0 %v679, 108
        %v682 = vpop.permute.xlu0 %681
        %v683 = vrot.slane %v682, 1
        %vm684 = vcmask 883712
        %v685 = vsel %vm684, %v682, %v683
        %v687 = vadd.f32 %v669, %v685
        %s688 = sld [smem:[#allocation8 + $0xc]]
        %v689 = vld [vmem:[#allocation2] sm:$0x7]
        %v690 = vstv %s688
        %v691 = vmul.f32 %v689, %v690
        %692 = vrot.lane.b32.xlu0 %v549, 21
        %v693 = vpop.permute.xlu0 %692
        %v694 = vrot.slane %v693, 7
        %vm695 = vcmask 171008
        %v696 = vsel %vm695, %v694, %v693
        %v698 = vmul.f32 %v691, %v696
        %700 = vrot.lane.b32.xlu0 %v698, 107
        %v701 = vpop.permute.xlu0 %700
        %v702 = vrot.slane %v701, 1
        %vm703 = vcmask 875520
        %v704 = vsel %vm703, %v701, %v702
        %v706 = vadd.f32 %v687, %v704
        %s707 = sld [smem:[#allocation8 + $0xd]]
        %v708 = vld [vmem:[#allocation2] sm:$0x7]
        %v709 = vstv %s707
        %v710 = vmul.f32 %v708, %v709
        %711 = vrot.lane.b32.xlu0 %v585, 22
        %v712 = vpop.permute.xlu0 %711
        %v713 = vrot.slane %v712, 7
        %vm714 = vcmask 179200
        %v715 = vsel %vm714, %v713, %v712
        %v717 = vmul.f32 %v710, %v715
        %719 = vrot.lane.b32.xlu0 %v717, 106
        %v720 = vpop.permute.xlu0 %719
        %v721 = vrot.slane %v720, 1
        %vm722 = vcmask 867328
        %v723 = vsel %vm722, %v720, %v721
        %v725 = vadd.f32 %v706, %v723
        %s726 = sld [smem:[#allocation8 + $0xe]]
        %v727 = vld [vmem:[#allocation2] sm:$0x7]
        %v728 = vstv %s726
        %v729 = vmul.f32 %v727, %v728
        %730 = vrot.lane.b32.xlu0 %v406, 32
        %v731 = vpop.permute.xlu0 %730
        %v732 = vrot.slane %v731, 7
        %vm733 = vcmask 261120
        %v734 = vsel %vm733, %v732, %v731
        %v736 = vmul.f32 %v729, %v734
        %738 = vrot.lane.b32.xlu0 %v736, 96
        %v739 = vpop.permute.xlu0 %738
        %v740 = vrot.slane %v739, 1
        %vm741 = vcmask 785408
        %v742 = vsel %vm741, %v739, %v740
        %v744 = vadd.f32 %v725, %v742
        %s745 = sld [smem:[#allocation8 + $0xf]]
        %v746 = vld [vmem:[#allocation2] sm:$0x7]
        %v747 = vstv %s745
        %v748 = vmul.f32 %v746, %v747
        %749 = vrot.lane.b32.xlu0 %v430, 33
        %v750 = vpop.permute.xlu0 %749
        %v751 = vrot.slane %v750, 7
        %vm752 = vcmask 269312
        %v753 = vsel %vm752, %v751, %v750
        %v755 = vmul.f32 %v748, %v753
        %757 = vrot.lane.b32.xlu0 %v755, 95
        %v758 = vpop.permute.xlu0 %757
        %v759 = vrot.slane %v758, 1
        %vm760 = vcmask 777216
        %v761 = vsel %vm760, %v758, %v759
        %v763 = vadd.f32 %v744, %v761
        %s764 = sld [smem:[#allocation8 + $0x10]]
        %v765 = vld [vmem:[#allocation2] sm:$0x7]
        %v766 = vstv %s764
        %v767 = vmul.f32 %v765, %v766
        %768 = vrot.lane.b32.xlu0 %v466, 34
        %v769 = vpop.permute.xlu0 %768
        %v770 = vrot.slane %v769, 7
        %vm771 = vcmask 277504
        %v772 = vsel %vm771, %v770, %v769
        %v774 = vmul.f32 %v767, %v772
        %776 = vrot.lane.b32.xlu0 %v774, 94
        %v777 = vpop.permute.xlu0 %776
        %v778 = vrot.slane %v777, 1
        %vm779 = vcmask 769024
        %v780 = vsel %vm779, %v777, %v778
        %v782 = vadd.f32 %v763, %v780
        %s783 = sld [smem:[#allocation8 + $0x11]]
        %v784 = vld [vmem:[#allocation2] sm:$0x7]
        %v785 = vstv %s783
        %v786 = vmul.f32 %v784, %v785
        %788 = vrot.lane.b32.xlu0 %v786, 93
        %v789 = vpop.permute.xlu0 %788
        %v790 = vrot.slane %v789, 1
        %vm791 = vcmask 760832
        %v792 = vsel %vm791, %v789, %v790
        %v794 = vadd.f32 %v782, %v792
        %s795 = sld [smem:[#allocation8 + $0x12]]
        %v796 = vstv %s795
        %v797 = vmul.f32 %v784, %v796
        %798 = vrot.lane.b32.xlu0 %v513, 36
        %v799 = vpop.permute.xlu0 %798
        %v800 = vrot.slane %v799, 7
        %vm801 = vcmask 293888
        %v802 = vsel %vm801, %v800, %v799
        %v804 = vmul.f32 %v797, %v802
        %806 = vrot.lane.b32.xlu0 %v804, 92
        %v807 = vpop.permute.xlu0 %806
        %v808 = vrot.slane %v807, 1
        %vm809 = vcmask 752640
        %v810 = vsel %vm809, %v807, %v808
        %v812 = vadd.f32 %v794, %v810
        %s813 = sld [smem:[#allocation8 + $0x13]]
        %v814 = vld [vmem:[#allocation2] sm:$0x7]
        %v815 = vstv %s813
        %v816 = vmul.f32 %v814, %v815
        %817 = vrot.lane.b32.xlu0 %v549, 37
        %v818 = vpop.permute.xlu0 %817
        %v819 = vrot.slane %v818, 7
        %vm820 = vcmask 302080
        %v821 = vsel %vm820, %v819, %v818
        %v823 = vmul.f32 %v816, %v821
        %825 = vrot.lane.b32.xlu0 %v823, 91
        %v826 = vpop.permute.xlu0 %825
        %v827 = vrot.slane %v826, 1
        %vm828 = vcmask 744448
        %v829 = vsel %vm828, %v826, %v827
        %v831 = vadd.f32 %v812, %v829
        %s832 = sld [smem:[#allocation8 + $0x14]]
        %v833 = vld [vmem:[#allocation2] sm:$0x7]
        %v834 = vstv %s832
        %v835 = vmul.f32 %v833, %v834
        %836 = vrot.lane.b32.xlu0 %v585, 38
        %v837 = vpop.permute.xlu0 %836
        %v838 = vrot.slane %v837, 7
        %vm839 = vcmask 310272
        %v840 = vsel %vm839, %v838, %v837
        %v842 = vmul.f32 %v835, %v840
        %844 = vrot.lane.b32.xlu0 %v842, 90
        %v845 = vpop.permute.xlu0 %844
        %v846 = vrot.slane %v845, 1
        %vm847 = vcmask 736256
        %v848 = vsel %vm847, %v845, %v846
        %v850 = vadd.f32 %v831, %v848
        %s851 = sld [smem:[#allocation8 + $0x15]]
        %v852 = vld [vmem:[#allocation2] sm:$0x7]
        %v853 = vstv %s851
        %v854 = vmul.f32 %v852, %v853
        %855 = vrot.lane.b32.xlu0 %v406, 48
        %v856 = vpop.permute.xlu0 %855
        %v857 = vrot.slane %v856, 7
        %vm858 = vcmask 392192
        %v859 = vsel %vm858, %v857, %v856
        %v861 = vmul.f32 %v854, %v859
        %863 = vrot.lane.b32.xlu0 %v861, 80
        %v864 = vpop.permute.xlu0 %863
        %v865 = vrot.slane %v864, 1
        %vm866 = vcmask 654336
        %v867 = vsel %vm866, %v864, %v865
        %v869 = vadd.f32 %v850, %v867
        %s870 = sld [smem:[#allocation8 + $0x16]]
        %v871 = vld [vmem:[#allocation2] sm:$0x7]
        %v872 = vstv %s870
        %v873 = vmul.f32 %v871, %v872
        %874 = vrot.lane.b32.xlu0 %v430, 49
        %v875 = vpop.permute.xlu0 %874
        %v876 = vrot.slane %v875, 7
        %vm877 = vcmask 400384
        %v878 = vsel %vm877, %v876, %v875
        %v880 = vmul.f32 %v873, %v878
        %882 = vrot.lane.b32.xlu0 %v880, 79
        %v883 = vpop.permute.xlu0 %882
        %v884 = vrot.slane %v883, 1
        %vm885 = vcmask 646144
        %v886 = vsel %vm885, %v883, %v884
        %v888 = vadd.f32 %v869, %v886
        %s889 = sld [smem:[#allocation8 + $0x17]]
        %v890 = vld [vmem:[#allocation2] sm:$0x7]
        %v891 = vstv %s889
        %v892 = vmul.f32 %v890, %v891
        %893 = vrot.lane.b32.xlu0 %v466, 50
        %v894 = vpop.permute.xlu0 %893
        %v895 = vrot.slane %v894, 7
        %vm896 = vcmask 408576
        %v897 = vsel %vm896, %v895, %v894
        %v899 = vmul.f32 %v892, %v897
        %901 = vrot.lane.b32.xlu0 %v899, 78
        %v902 = vpop.permute.xlu0 %901
        %v903 = vrot.slane %v902, 1
        %vm904 = vcmask 637952
        %v905 = vsel %vm904, %v902, %v903
        %v907 = vadd.f32 %v888, %v905
        %s908 = sld [smem:[#allocation8 + $0x18]]
        %v909 = vld [vmem:[#allocation2] sm:$0x7]
        %v910 = vstv %s908
        %v911 = vmul.f32 %v909, %v910
        %913 = vrot.lane.b32.xlu0 %v911, 77
        %v914 = vpop.permute.xlu0 %913
        %v915 = vrot.slane %v914, 1
        %vm916 = vcmask 629760
        %v917 = vsel %vm916, %v914, %v915
        %v919 = vadd.f32 %v907, %v917
        %s920 = sld [smem:[#allocation8 + $0x19]]
        %v921 = vstv %s920
        %v922 = vmul.f32 %v909, %v921
        %923 = vrot.lane.b32.xlu0 %v513, 52
        %v924 = vpop.permute.xlu0 %923
        %v925 = vrot.slane %v924, 7
        %vm926 = vcmask 424960
        %v927 = vsel %vm926, %v925, %v924
        %v929 = vmul.f32 %v922, %v927
        %931 = vrot.lane.b32.xlu0 %v929, 76
        %v932 = vpop.permute.xlu0 %931
        %v933 = vrot.slane %v932, 1
        %vm934 = vcmask 621568
        %v935 = vsel %vm934, %v932, %v933
        %v937 = vadd.f32 %v919, %v935
        %s938 = sld [smem:[#allocation8 + $0x1a]]
        %v939 = vld [vmem:[#allocation2] sm:$0x7]
        %v940 = vstv %s938
        %v941 = vmul.f32 %v939, %v940
        %942 = vrot.lane.b32.xlu0 %v549, 53
        %v943 = vpop.permute.xlu0 %942
        %v944 = vrot.slane %v943, 7
        %vm945 = vcmask 433152
        %v946 = vsel %vm945, %v944, %v943
        %v948 = vmul.f32 %v941, %v946
        %950 = vrot.lane.b32.xlu0 %v948, 75
        %v951 = vpop.permute.xlu0 %950
        %v952 = vrot.slane %v951, 1
        %vm953 = vcmask 613376
        %v954 = vsel %vm953, %v951, %v952
        %v956 = vadd.f32 %v937, %v954
        %s957 = sld [smem:[#allocation8 + $0x1b]]
        %v958 = vld [vmem:[#allocation2] sm:$0x7]
        %v959 = vstv %s957
        %v960 = vmul.f32 %v958, %v959
        %961 = vrot.lane.b32.xlu0 %v585, 54
        %v962 = vpop.permute.xlu0 %961
        %v963 = vrot.slane %v962, 7
        %vm964 = vcmask 441344
        %v965 = vsel %vm964, %v963, %v962
        %v967 = vmul.f32 %v960, %v965
        %969 = vrot.lane.b32.xlu0 %v967, 74
        %v970 = vpop.permute.xlu0 %969
        %v971 = vrot.slane %v970, 1
        %vm972 = vcmask 605184
        %v973 = vsel %vm972, %v970, %v971
        %v975 = vadd.f32 %v956, %v973
        %s976 = sld [smem:[#allocation8 + $0x1c]]
        %v977 = vld [vmem:[#allocation2] sm:$0x7]
        %v978 = vstv %s976
        %v979 = vmul.f32 %v977, %v978
        %980 = vrot.lane.b32.xlu0 %v406, 64
        %v981 = vpop.permute.xlu0 %980
        %v982 = vrot.slane %v981, 7
        %vm983 = vcmask 523264
        %v984 = vsel %vm983, %v982, %v981
        %v986 = vmul.f32 %v979, %v984
        %988 = vrot.lane.b32.xlu0 %v986, 64
        %v989 = vpop.permute.xlu0 %988
        %v990 = vrot.slane %v989, 1
        %v991 = vsel %vm983, %v989, %v990
        %v993 = vadd.f32 %v975, %v991
        %s994 = sld [smem:[#allocation8 + $0x1d]]
        %v995 = vld [vmem:[#allocation2] sm:$0x7]
        %v996 = vstv %s994
        %v997 = vmul.f32 %v995, %v996
        %998 = vrot.lane.b32.xlu0 %v430, 65
        %v999 = vpop.permute.xlu0 %998
        %v1000 = vrot.slane %v999, 7
        %vm1001 = vcmask 531456
        %v1002 = vsel %vm1001, %v1000, %v999
        %v1004 = vmul.f32 %v997, %v1002
        %1006 = vrot.lane.b32.xlu0 %v1004, 63
        %v1007 = vpop.permute.xlu0 %1006
        %v1008 = vrot.slane %v1007, 1
        %vm1009 = vcmask 515072
        %v1010 = vsel %vm1009, %v1007, %v1008
        %v1012 = vadd.f32 %v993, %v1010
        %s1013 = sld [smem:[#allocation8 + $0x1e]]
        %v1014 = vld [vmem:[#allocation2] sm:$0x7]
        %v1015 = vstv %s1013
        %v1016 = vmul.f32 %v1014, %v1015
        %1017 = vrot.lane.b32.xlu0 %v466, 66
        %v1018 = vpop.permute.xlu0 %1017
        %v1019 = vrot.slane %v1018, 7
        %vm1020 = vcmask 539648
        %v1021 = vsel %vm1020, %v1019, %v1018
        %v1023 = vmul.f32 %v1016, %v1021
        %1025 = vrot.lane.b32.xlu0 %v1023, 62
        %v1026 = vpop.permute.xlu0 %1025
        %v1027 = vrot.slane %v1026, 1
        %vm1028 = vcmask 506880
        %v1029 = vsel %vm1028, %v1026, %v1027
        %v1031 = vadd.f32 %v1012, %v1029
        %s1032 = sld [smem:[#allocation8 + $0x1f]]
        %v1033 = vld [vmem:[#allocation2] sm:$0x7]
        %v1034 = vstv %s1032
        %v1035 = vmul.f32 %v1033, %v1034
        %1037 = vrot.lane.b32.xlu0 %v1035, 61
        %v1038 = vpop.permute.xlu0 %1037
        %v1039 = vrot.slane %v1038, 1
        %vm1040 = vcmask 498688
        %v1041 = vsel %vm1040, %v1038, %v1039
        %v1043 = vadd.f32 %v1031, %v1041
        %s1044 = sld [smem:[#allocation8 + $0x20]]
        %v1045 = vstv %s1044
        %v1046 = vmul.f32 %v1033, %v1045
        %1047 = vrot.lane.b32.xlu0 %v513, 68
        %v1048 = vpop.permute.xlu0 %1047
        %v1049 = vrot.slane %v1048, 7
        %vm1050 = vcmask 556032
        %v1051 = vsel %vm1050, %v1049, %v1048
        %v1053 = vmul.f32 %v1046, %v1051
        %1055 = vrot.lane.b32.xlu0 %v1053, 60
        %v1056 = vpop.permute.xlu0 %1055
        %v1057 = vrot.slane %v1056, 1
        %vm1058 = vcmask 490496
        %v1059 = vsel %vm1058, %v1056, %v1057
        %v1061 = vadd.f32 %v1043, %v1059
        %s1062 = sld [smem:[#allocation8 + $0x21]]
        %v1063 = vld [vmem:[#allocation2] sm:$0x7]
        %v1064 = vstv %s1062
        %v1065 = vmul.f32 %v1063, %v1064
        %1066 = vrot.lane.b32.xlu0 %v549, 69
        %v1067 = vpop.permute.xlu0 %1066
        %v1068 = vrot.slane %v1067, 7
        %vm1069 = vcmask 564224
        %v1070 = vsel %vm1069, %v1068, %v1067
        %v1072 = vmul.f32 %v1065, %v1070
        %1074 = vrot.lane.b32.xlu0 %v1072, 59
        %v1075 = vpop.permute.xlu0 %1074
        %v1076 = vrot.slane %v1075, 1
        %vm1077 = vcmask 482304
        %v1078 = vsel %vm1077, %v1075, %v1076
        %v1080 = vadd.f32 %v1061, %v1078
        %s1081 = sld [smem:[#allocation8 + $0x22]]
        %v1082 = vld [vmem:[#allocation2] sm:$0x7]
        %v1083 = vstv %s1081
        %v1084 = vmul.f32 %v1082, %v1083
        %1085 = vrot.lane.b32.xlu0 %v585, 70
        %v1086 = vpop.permute.xlu0 %1085
        %v1087 = vrot.slane %v1086, 7
        %vm1088 = vcmask 572416
        %v1089 = vsel %vm1088, %v1087, %v1086
        %v1091 = vmul.f32 %v1084, %v1089
        %1093 = vrot.lane.b32.xlu0 %v1091, 58
        %v1094 = vpop.permute.xlu0 %1093
        %v1095 = vrot.slane %v1094, 1
        %vm1096 = vcmask 474112
        %v1097 = vsel %vm1096, %v1094, %v1095
        %v1099 = vadd.f32 %v1080, %v1097
        %s1100 = sld [smem:[#allocation8 + $0x23]]
        %v1101 = vld [vmem:[#allocation2] sm:$0x7]
        %v1102 = vstv %s1100
        %v1103 = vmul.f32 %v1101, %v1102
        %1104 = vrot.lane.b32.xlu0 %v406, 80
        %v1105 = vpop.permute.xlu0 %1104
        %v1106 = vrot.slane %v1105, 7
        %v1107 = vsel %vm866, %v1106, %v1105
        %v1109 = vmul.f32 %v1103, %v1107
        %1111 = vrot.lane.b32.xlu0 %v1109, 48
        %v1112 = vpop.permute.xlu0 %1111
        %v1113 = vrot.slane %v1112, 1
        %v1114 = vsel %vm858, %v1112, %v1113
        %v1116 = vadd.f32 %v1099, %v1114
        %s1117 = sld [smem:[#allocation8 + $0x24]]
        %v1118 = vld [vmem:[#allocation2] sm:$0x7]
        %v1119 = vstv %s1117
        %v1120 = vmul.f32 %v1118, %v1119
        %1121 = vrot.lane.b32.xlu0 %v430, 81
        %v1122 = vpop.permute.xlu0 %1121
        %v1123 = vrot.slane %v1122, 7
        %vm1124 = vcmask 662528
        %v1125 = vsel %vm1124, %v1123, %v1122
        %v1127 = vmul.f32 %v1120, %v1125
        %1129 = vrot.lane.b32.xlu0 %v1127, 47
        %v1130 = vpop.permute.xlu0 %1129
        %v1131 = vrot.slane %v1130, 1
        %vm1132 = vcmask 384000
        %v1133 = vsel %vm1132, %v1130, %v1131
        %v1135 = vadd.f32 %v1116, %v1133
        %s1136 = sld [smem:[#allocation8 + $0x25]]
        %v1137 = vld [vmem:[#allocation2] sm:$0x7]
        %v1138 = vstv %s1136
        %v1139 = vmul.f32 %v1137, %v1138
        %1140 = vrot.lane.b32.xlu0 %v466, 82
        %v1141 = vpop.permute.xlu0 %1140
        %v1142 = vrot.slane %v1141, 7
        %vm1143 = vcmask 670720
        %v1144 = vsel %vm1143, %v1142, %v1141
        %v1146 = vmul.f32 %v1139, %v1144
        %1148 = vrot.lane.b32.xlu0 %v1146, 46
        %v1149 = vpop.permute.xlu0 %1148
        %v1150 = vrot.slane %v1149, 1
        %vm1151 = vcmask 375808
        %v1152 = vsel %vm1151, %v1149, %v1150
        %v1154 = vadd.f32 %v1135, %v1152
        %s1155 = sld [smem:[#allocation8 + $0x26]]
        %v1156 = vld [vmem:[#allocation2] sm:$0x7]
        %v1157 = vstv %s1155
        %v1158 = vmul.f32 %v1156, %v1157
        %1160 = vrot.lane.b32.xlu0 %v1158, 45
        %v1161 = vpop.permute.xlu0 %1160
        %v1162 = vrot.slane %v1161, 1
        %vm1163 = vcmask 367616
        %v1164 = vsel %vm1163, %v1161, %v1162
        %v1166 = vadd.f32 %v1154, %v1164
        %s1167 = sld [smem:[#allocation8 + $0x27]]
        %v1168 = vstv %s1167
        %v1169 = vmul.f32 %v1156, %v1168
        %1170 = vrot.lane.b32.xlu0 %v513, 84
        %v1171 = vpop.permute.xlu0 %1170
        %v1172 = vrot.slane %v1171, 7
        %vm1173 = vcmask 687104
        %v1174 = vsel %vm1173, %v1172, %v1171
        %v1176 = vmul.f32 %v1169, %v1174
        %1178 = vrot.lane.b32.xlu0 %v1176, 44
        %v1179 = vpop.permute.xlu0 %1178
        %v1180 = vrot.slane %v1179, 1
        %vm1181 = vcmask 359424
        %v1182 = vsel %vm1181, %v1179, %v1180
        %v1184 = vadd.f32 %v1166, %v1182
        %s1185 = sld [smem:[#allocation8 + $0x28]]
        %v1186 = vld [vmem:[#allocation2] sm:$0x7]
        %v1187 = vstv %s1185
        %v1188 = vmul.f32 %v1186, %v1187
        %1189 = vrot.lane.b32.xlu0 %v549, 85
        %v1190 = vpop.permute.xlu0 %1189
        %v1191 = vrot.slane %v1190, 7
        %vm1192 = vcmask 695296
        %v1193 = vsel %vm1192, %v1191, %v1190
        %v1195 = vmul.f32 %v1188, %v1193
        %1197 = vrot.lane.b32.xlu0 %v1195, 43
        %v1198 = vpop.permute.xlu0 %1197
        %v1199 = vrot.slane %v1198, 1
        %vm1200 = vcmask 351232
        %v1201 = vsel %vm1200, %v1198, %v1199
        %v1203 = vadd.f32 %v1184, %v1201
        %s1204 = sld [smem:[#allocation8 + $0x29]]
        %v1205 = vld [vmem:[#allocation2] sm:$0x7]
        %v1206 = vstv %s1204
        %v1207 = vmul.f32 %v1205, %v1206
        %1208 = vrot.lane.b32.xlu0 %v585, 86
        %v1209 = vpop.permute.xlu0 %1208
        %v1210 = vrot.slane %v1209, 7
        %vm1211 = vcmask 703488
        %v1212 = vsel %vm1211, %v1210, %v1209
        %v1214 = vmul.f32 %v1207, %v1212
        %1216 = vrot.lane.b32.xlu0 %v1214, 42
        %v1217 = vpop.permute.xlu0 %1216
        %v1218 = vrot.slane %v1217, 1
        %vm1219 = vcmask 343040
        %v1220 = vsel %vm1219, %v1217, %v1218
        %v1222 = vadd.f32 %v1203, %v1220
        %s1223 = sld [smem:[#allocation8 + $0x2a]]
        %v1224 = vld [vmem:[#allocation2] sm:$0x7]
        %v1225 = vstv %s1223
        %v1226 = vmul.f32 %v1224, %v1225
        %1227 = vrot.lane.b32.xlu0 %v406, 96
        %v1228 = vpop.permute.xlu0 %1227
        %v1229 = vrot.slane %v1228, 7
        %v1230 = vsel %vm741, %v1229, %v1228
        %v1232 = vmul.f32 %v1226, %v1230
        %1234 = vrot.lane.b32.xlu0 %v1232, 32
        %v1235 = vpop.permute.xlu0 %1234
        %v1236 = vrot.slane %v1235, 1
        %v1237 = vsel %vm733, %v1235, %v1236
        %v1239 = vadd.f32 %v1222, %v1237
        %s1240 = sld [smem:[#allocation8 + $0x2b]]
        %v1241 = vld [vmem:[#allocation2] sm:$0x7]
        %v1242 = vstv %s1240
        %v1243 = vmul.f32 %v1241, %v1242
        %1244 = vrot.lane.b32.xlu0 %v430, 97
        %v1245 = vpop.permute.xlu0 %1244
        %v1246 = vrot.slane %v1245, 7
        %vm1247 = vcmask 793600
        %v1248 = vsel %vm1247, %v1246, %v1245
        %v1250 = vmul.f32 %v1243, %v1248
        %1252 = vrot.lane.b32.xlu0 %v1250, 31
        %v1253 = vpop.permute.xlu0 %1252
        %v1254 = vrot.slane %v1253, 1
        %vm1255 = vcmask 252928
        %v1256 = vsel %vm1255, %v1253, %v1254
        %v1258 = vadd.f32 %v1239, %v1256
        %s1259 = sld [smem:[#allocation8 + $0x2c]]
        %v1260 = vld [vmem:[#allocation2] sm:$0x7]
        %v1261 = vstv %s1259
        %v1262 = vmul.f32 %v1260, %v1261
        %1263 = vrot.lane.b32.xlu0 %v466, 98
        %v1264 = vpop.permute.xlu0 %1263
        %v1265 = vrot.slane %v1264, 7
        %vm1266 = vcmask 801792
        %v1267 = vsel %vm1266, %v1265, %v1264
        %v1269 = vmul.f32 %v1262, %v1267
        %1271 = vrot.lane.b32.xlu0 %v1269, 30
        %v1272 = vpop.permute.xlu0 %1271
        %v1273 = vrot.slane %v1272, 1
        %vm1274 = vcmask 244736
        %v1275 = vsel %vm1274, %v1272, %v1273
        %v1277 = vadd.f32 %v1258, %v1275
        %s1278 = sld [smem:[#allocation8 + $0x2d]]
        %v1279 = vld [vmem:[#allocation2] sm:$0x7]
        %v1280 = vstv %s1278
        %v1281 = vmul.f32 %v1279, %v1280
        %1283 = vrot.lane.b32.xlu0 %v1281, 29
        %v1284 = vpop.permute.xlu0 %1283
        %v1285 = vrot.slane %v1284, 1
        %vm1286 = vcmask 236544
        %v1287 = vsel %vm1286, %v1284, %v1285
        %v1289 = vadd.f32 %v1277, %v1287
        %s1290 = sld [smem:[#allocation8 + $0x2e]]
        %v1291 = vstv %s1290
        %v1292 = vmul.f32 %v1279, %v1291
        %1293 = vrot.lane.b32.xlu0 %v513, 100
        %v1294 = vpop.permute.xlu0 %1293
        %v1295 = vrot.slane %v1294, 7
        %vm1296 = vcmask 818176
        %v1297 = vsel %vm1296, %v1295, %v1294
        %v1299 = vmul.f32 %v1292, %v1297
        %1301 = vrot.lane.b32.xlu0 %v1299, 28
        %v1302 = vpop.permute.xlu0 %1301
        %v1303 = vrot.slane %v1302, 1
        %vm1304 = vcmask 228352
        %v1305 = vsel %vm1304, %v1302, %v1303
        %v1307 = vadd.f32 %v1289, %v1305
        %s1308 = sld [smem:[#allocation8 + $0x2f]]
        %v1309 = vld [vmem:[#allocation2] sm:$0x7]
        %v1310 = vstv %s1308
        %v1311 = vmul.f32 %v1309, %v1310
        %1312 = vrot.lane.b32.xlu0 %v549, 101
        %v1313 = vpop.permute.xlu0 %1312
        %v1314 = vrot.slane %v1313, 7
        %vm1315 = vcmask 826368
        %v1316 = vsel %vm1315, %v1314, %v1313
        %v1318 = vmul.f32 %v1311, %v1316
        %1320 = vrot.lane.b32.xlu0 %v1318, 27
        %v1321 = vpop.permute.xlu0 %1320
        %v1322 = vrot.slane %v1321, 1
        %vm1323 = vcmask 220160
        %v1324 = vsel %vm1323, %v1321, %v1322
        %v1326 = vadd.f32 %v1307, %v1324
        %s1327 = sld [smem:[#allocation8 + $0x30]]
        %v1328 = vld [vmem:[#allocation2] sm:$0x7]
        %v1329 = vstv %s1327
        %v1330 = vmul.f32 %v1328, %v1329
        %1331 = vrot.lane.b32.xlu0 %v585, 102
        %v1332 = vpop.permute.xlu0 %1331
        %v1333 = vrot.slane %v1332, 7
        %vm1334 = vcmask 834560
        %v1335 = vsel %vm1334, %v1333, %v1332
        %v1337 = vmul.f32 %v1330, %v1335
        %1339 = vrot.lane.b32.xlu0 %v1337, 26
        %v1340 = vpop.permute.xlu0 %1339
        %v1341 = vrot.slane %v1340, 1
        %vm1342 = vcmask 211968
        %v1343 = vsel %vm1342, %v1340, %v1341
        %v1345 = vadd.f32 %v1326, %v1343
        %s1346 = sld [smem:[#allocation8 + $0x31]]
        %v1347 = vld [vmem:[%s297] sm:$0x3]
        %v1348 = vstv %s1346
        %v1349 = vmul.f32 %v1347, %v1348
        %v1350 = vmul.f32 %v1349, %v406
        %v1351 = vadd.f32 %v1345, %v1350
        %s1352 = sld [smem:[#allocation8 + $0x32]]
        %v1353 = vld [vmem:[%s297] sm:$0x7]
        %v1354 = vstv %s1352
        %v1355 = vmul.f32 %v1353, %v1354
        %v1356 = vmul.f32 %v1355, %v435
        %1358 = vrot.lane.b32.xlu0 %v1356, 127
        %v1359 = vpop.permute.xlu0 %1358
        %v1360 = vrot.slane %v1359, 1
        %v1361 = vsel %vm442, %v1359, %v1360
        %v1363 = vadd.f32 %v1351, %v1361
        %s1364 = sld [smem:[#allocation8 + $0x33]]
        %v1365 = vld [vmem:[%s297] sm:$0x7]
        %v1366 = vstv %s1364
        %v1367 = vmul.f32 %v1365, %v1366
        %v1368 = vmul.f32 %v1367, %v471
        %1370 = vrot.lane.b32.xlu0 %v1368, 126
        %v1371 = vpop.permute.xlu0 %1370
        %v1372 = vrot.slane %v1371, 1
        %v1373 = vsel %vm478, %v1371, %v1372
        %v1375 = vadd.f32 %v1363, %v1373
        %s1376 = sld [smem:[#allocation8 + $0x34]]
        %v1377 = vld [vmem:[%s297] sm:$0x7]
        %v1378 = vstv %s1376
        %v1379 = vmul.f32 %v1377, %v1378
        %1381 = vrot.lane.b32.xlu0 %v1379, 125
        %v1382 = vpop.permute.xlu0 %1381
        %v1383 = vrot.slane %v1382, 1
        %v1384 = vsel %vm490, %v1382, %v1383
        %v1386 = vadd.f32 %v1375, %v1384
        %s1387 = sld [smem:[#allocation8 + $0x35]]
        %v1388 = vstv %s1387
        %v1389 = vmul.f32 %v1377, %v1388
        %v1390 = vmul.f32 %v1389, %v518
        %1392 = vrot.lane.b32.xlu0 %v1390, 124
        %v1393 = vpop.permute.xlu0 %1392
        %v1394 = vrot.slane %v1393, 1
        %v1395 = vsel %vm525, %v1393, %v1394
        %v1397 = vadd.f32 %v1386, %v1395
        %s1398 = sld [smem:[#allocation8 + $0x36]]
        %v1399 = vld [vmem:[%s297] sm:$0x7]
        %v1400 = vstv %s1398
        %v1401 = vmul.f32 %v1399, %v1400
        %v1402 = vmul.f32 %v1401, %v554
        %1404 = vrot.lane.b32.xlu0 %v1402, 123
        %v1405 = vpop.permute.xlu0 %1404
        %v1406 = vrot.slane %v1405, 1
        %v1407 = vsel %vm561, %v1405, %v1406
        %v1409 = vadd.f32 %v1397, %v1407
        %s1410 = sld [smem:[#allocation8 + $0x37]]
        %v1411 = vld [vmem:[%s297] sm:$0x7]
        %v1412 = vstv %s1410
        %v1413 = vmul.f32 %v1411, %v1412
        %v1414 = vmul.f32 %v1413, %v590
        %1416 = vrot.lane.b32.xlu0 %v1414, 122
        %v1417 = vpop.permute.xlu0 %1416
        %v1418 = vrot.slane %v1417, 1
        %v1419 = vsel %vm597, %v1417, %v1418
        %v1421 = vadd.f32 %v1409, %v1419
        %s1422 = sld [smem:[#allocation8 + $0x38]]
        %v1423 = vld [vmem:[%s297] sm:$0x7]
        %v1424 = vstv %s1422
        %v1425 = vmul.f32 %v1423, %v1424
        %v1426 = vmul.f32 %v1425, %v609
        %1428 = vrot.lane.b32.xlu0 %v1426, 112
        %v1429 = vpop.permute.xlu0 %1428
        %v1430 = vrot.slane %v1429, 1
        %v1431 = vsel %vm616, %v1429, %v1430
        %v1433 = vadd.f32 %v1421, %v1431
        %s1434 = sld [smem:[#allocation8 + $0x39]]
        %v1435 = vld [vmem:[%s297] sm:$0x7]
        %v1436 = vstv %s1434
        %v1437 = vmul.f32 %v1435, %v1436
        %v1438 = vmul.f32 %v1437, %v628
        %1440 = vrot.lane.b32.xlu0 %v1438, 111
        %v1441 = vpop.permute.xlu0 %1440
        %v1442 = vrot.slane %v1441, 1
        %v1443 = vsel %vm635, %v1441, %v1442
        %v1445 = vadd.f32 %v1433, %v1443
        %s1446 = sld [smem:[#allocation8 + $0x3a]]
        %v1447 = vld [vmem:[%s297] sm:$0x7]
        %v1448 = vstv %s1446
        %v1449 = vmul.f32 %v1447, %v1448
        %v1450 = vmul.f32 %v1449, %v647
        %1452 = vrot.lane.b32.xlu0 %v1450, 110
        %v1453 = vpop.permute.xlu0 %1452
        %v1454 = vrot.slane %v1453, 1
        %v1455 = vsel %vm654, %v1453, %v1454
        %v1457 = vadd.f32 %v1445, %v1455
        %s1458 = sld [smem:[#allocation8 + $0x3b]]
        %v1459 = vld [vmem:[%s297] sm:$0x7]
        %v1460 = vstv %s1458
        %v1461 = vmul.f32 %v1459, %v1460
        %1463 = vrot.lane.b32.xlu0 %v1461, 109
        %v1464 = vpop.permute.xlu0 %1463
        %v1465 = vrot.slane %v1464, 1
        %v1466 = vsel %vm666, %v1464, %v1465
        %v1468 = vadd.f32 %v1457, %v1466
        %s1469 = sld [smem:[#allocation8 + $0x3c]]
        %v1470 = vstv %s1469
        %v1471 = vmul.f32 %v1459, %v1470
        %v1472 = vmul.f32 %v1471, %v677
        %1474 = vrot.lane.b32.xlu0 %v1472, 108
        %v1475 = vpop.permute.xlu0 %1474
        %v1476 = vrot.slane %v1475, 1
        %v1477 = vsel %vm684, %v1475, %v1476
        %v1479 = vadd.f32 %v1468, %v1477
        %s1480 = sld [smem:[#allocation8 + $0x3d]]
        %v1481 = vld [vmem:[%s297] sm:$0x7]
        %v1482 = vstv %s1480
        %v1483 = vmul.f32 %v1481, %v1482
        %v1484 = vmul.f32 %v1483, %v696
        %1486 = vrot.lane.b32.xlu0 %v1484, 107
        %v1487 = vpop.permute.xlu0 %1486
        %v1488 = vrot.slane %v1487, 1
        %v1489 = vsel %vm703, %v1487, %v1488
        %v1491 = vadd.f32 %v1479, %v1489
        %s1492 = sld [smem:[#allocation8 + $0x3e]]
        %v1493 = vld [vmem:[%s297] sm:$0x7]
        %v1494 = vstv %s1492
        %v1495 = vmul.f32 %v1493, %v1494
        %v1496 = vmul.f32 %v1495, %v715
        %1498 = vrot.lane.b32.xlu0 %v1496, 106
        %v1499 = vpop.permute.xlu0 %1498
        %v1500 = vrot.slane %v1499, 1
        %v1501 = vsel %vm722, %v1499, %v1500
        %v1503 = vadd.f32 %v1491, %v1501
        %s1504 = sld [smem:[#allocation8 + $0x3f]]
        %v1505 = vld [vmem:[%s297] sm:$0x7]
        %v1506 = vstv %s1504
        %v1507 = vmul.f32 %v1505, %v1506
        %v1508 = vmul.f32 %v1507, %v734
        %1510 = vrot.lane.b32.xlu0 %v1508, 96
        %v1511 = vpop.permute.xlu0 %1510
        %v1512 = vrot.slane %v1511, 1
        %v1513 = vsel %vm741, %v1511, %v1512
        %v1515 = vadd.f32 %v1503, %v1513
        %s1516 = sld [smem:[#allocation8 + $0x40]]
        %v1517 = vld [vmem:[%s297] sm:$0x7]
        %v1518 = vstv %s1516
        %v1519 = vmul.f32 %v1517, %v1518
        %v1520 = vmul.f32 %v1519, %v753
        %1522 = vrot.lane.b32.xlu0 %v1520, 95
        %v1523 = vpop.permute.xlu0 %1522
        %v1524 = vrot.slane %v1523, 1
        %v1525 = vsel %vm760, %v1523, %v1524
        %v1527 = vadd.f32 %v1515, %v1525
        %s1528 = sld [smem:[#allocation8 + $0x41]]
        %v1529 = vld [vmem:[%s297] sm:$0x7]
        %v1530 = vstv %s1528
        %v1531 = vmul.f32 %v1529, %v1530
        %v1532 = vmul.f32 %v1531, %v772
        %1534 = vrot.lane.b32.xlu0 %v1532, 94
        %v1535 = vpop.permute.xlu0 %1534
        %v1536 = vrot.slane %v1535, 1
        %v1537 = vsel %vm779, %v1535, %v1536
        %v1539 = vadd.f32 %v1527, %v1537
        %s1540 = sld [smem:[#allocation8 + $0x42]]
        %v1541 = vld [vmem:[%s297] sm:$0x7]
        %v1542 = vstv %s1540
        %v1543 = vmul.f32 %v1541, %v1542
        %1545 = vrot.lane.b32.xlu0 %v1543, 93
        %v1546 = vpop.permute.xlu0 %1545
        %v1547 = vrot.slane %v1546, 1
        %v1548 = vsel %vm791, %v1546, %v1547
        %v1550 = vadd.f32 %v1539, %v1548
        %s1551 = sld [smem:[#allocation8 + $0x43]]
        %v1552 = vstv %s1551
        %v1553 = vmul.f32 %v1541, %v1552
        %v1554 = vmul.f32 %v1553, %v802
        %1556 = vrot.lane.b32.xlu0 %v1554, 92
        %v1557 = vpop.permute.xlu0 %1556
        %v1558 = vrot.slane %v1557, 1
        %v1559 = vsel %vm809, %v1557, %v1558
        %v1561 = vadd.f32 %v1550, %v1559
        %s1562 = sld [smem:[#allocation8 + $0x44]]
        %v1563 = vld [vmem:[%s297] sm:$0x7]
        %v1564 = vstv %s1562
        %v1565 = vmul.f32 %v1563, %v1564
        %v1566 = vmul.f32 %v1565, %v821
        %1568 = vrot.lane.b32.xlu0 %v1566, 91
        %v1569 = vpop.permute.xlu0 %1568
        %v1570 = vrot.slane %v1569, 1
        %v1571 = vsel %vm828, %v1569, %v1570
        %v1573 = vadd.f32 %v1561, %v1571
        %s1574 = sld [smem:[#allocation8 + $0x45]]
        %v1575 = vld [vmem:[%s297] sm:$0x7]
        %v1576 = vstv %s1574
        %v1577 = vmul.f32 %v1575, %v1576
        %v1578 = vmul.f32 %v1577, %v840
        %1580 = vrot.lane.b32.xlu0 %v1578, 90
        %v1581 = vpop.permute.xlu0 %1580
        %v1582 = vrot.slane %v1581, 1
        %v1583 = vsel %vm847, %v1581, %v1582
        %v1585 = vadd.f32 %v1573, %v1583
        %s1586 = sld [smem:[#allocation8 + $0x46]]
        %v1587 = vld [vmem:[%s297] sm:$0x7]
        %v1588 = vstv %s1586
        %v1589 = vmul.f32 %v1587, %v1588
        %v1590 = vmul.f32 %v1589, %v859
        %1592 = vrot.lane.b32.xlu0 %v1590, 80
        %v1593 = vpop.permute.xlu0 %1592
        %v1594 = vrot.slane %v1593, 1
        %v1595 = vsel %vm866, %v1593, %v1594
        %v1597 = vadd.f32 %v1585, %v1595
        %s1598 = sld [smem:[#allocation8 + $0x47]]
        %v1599 = vld [vmem:[%s297] sm:$0x7]
        %v1600 = vstv %s1598
        %v1601 = vmul.f32 %v1599, %v1600
        %v1602 = vmul.f32 %v1601, %v878
        %1604 = vrot.lane.b32.xlu0 %v1602, 79
        %v1605 = vpop.permute.xlu0 %1604
        %v1606 = vrot.slane %v1605, 1
        %v1607 = vsel %vm885, %v1605, %v1606
        %v1609 = vadd.f32 %v1597, %v1607
        %s1610 = sld [smem:[#allocation8 + $0x48]]
        %v1611 = vld [vmem:[%s297] sm:$0x7]
        %v1612 = vstv %s1610
        %v1613 = vmul.f32 %v1611, %v1612
        %v1614 = vmul.f32 %v1613, %v897
        %1616 = vrot.lane.b32.xlu0 %v1614, 78
        %v1617 = vpop.permute.xlu0 %1616
        %v1618 = vrot.slane %v1617, 1
        %v1619 = vsel %vm904, %v1617, %v1618
        %v1621 = vadd.f32 %v1609, %v1619
        %s1622 = sld [smem:[#allocation8 + $0x49]]
        %v1623 = vld [vmem:[%s297] sm:$0x7]
        %v1624 = vstv %s1622
        %v1625 = vmul.f32 %v1623, %v1624
        %1627 = vrot.lane.b32.xlu0 %v1625, 77
        %v1628 = vpop.permute.xlu0 %1627
        %v1629 = vrot.slane %v1628, 1
        %v1630 = vsel %vm916, %v1628, %v1629
        %v1632 = vadd.f32 %v1621, %v1630
        %s1633 = sld [smem:[#allocation8 + $0x4a]]
        %v1634 = vstv %s1633
        %v1635 = vmul.f32 %v1623, %v1634
        %v1636 = vmul.f32 %v1635, %v927
        %1638 = vrot.lane.b32.xlu0 %v1636, 76
        %v1639 = vpop.permute.xlu0 %1638
        %v1640 = vrot.slane %v1639, 1
        %v1641 = vsel %vm934, %v1639, %v1640
        %v1643 = vadd.f32 %v1632, %v1641
        %s1644 = sld [smem:[#allocation8 + $0x4b]]
        %v1645 = vld [vmem:[%s297] sm:$0x7]
        %v1646 = vstv %s1644
        %v1647 = vmul.f32 %v1645, %v1646
        %v1648 = vmul.f32 %v1647, %v946
        %1650 = vrot.lane.b32.xlu0 %v1648, 75
        %v1651 = vpop.permute.xlu0 %1650
        %v1652 = vrot.slane %v1651, 1
        %v1653 = vsel %vm953, %v1651, %v1652
        %v1655 = vadd.f32 %v1643, %v1653
        %s1656 = sld [smem:[#allocation8 + $0x4c]]
        %v1657 = vld [vmem:[%s297] sm:$0x7]
        %v1658 = vstv %s1656
        %v1659 = vmul.f32 %v1657, %v1658
        %v1660 = vmul.f32 %v1659, %v965
        %1662 = vrot.lane.b32.xlu0 %v1660, 74
        %v1663 = vpop.permute.xlu0 %1662
        %v1664 = vrot.slane %v1663, 1
        %v1665 = vsel %vm972, %v1663, %v1664
        %v1667 = vadd.f32 %v1655, %v1665
        %s1668 = sld [smem:[#allocation8 + $0x4d]]
        %v1669 = vld [vmem:[%s297] sm:$0x7]
        %v1670 = vstv %s1668
        %v1671 = vmul.f32 %v1669, %v1670
        %v1672 = vmul.f32 %v1671, %v984
        %1674 = vrot.lane.b32.xlu0 %v1672, 64
        %v1675 = vpop.permute.xlu0 %1674
        %v1676 = vrot.slane %v1675, 1
        %v1677 = vsel %vm983, %v1675, %v1676
        %v1679 = vadd.f32 %v1667, %v1677
        %s1680 = sld [smem:[#allocation8 + $0x4e]]
        %v1681 = vld [vmem:[%s297] sm:$0x7]
        %v1682 = vstv %s1680
        %v1683 = vmul.f32 %v1681, %v1682
        %v1684 = vmul.f32 %v1683, %v1002
        %1686 = vrot.lane.b32.xlu0 %v1684, 63
        %v1687 = vpop.permute.xlu0 %1686
        %v1688 = vrot.slane %v1687, 1
        %v1689 = vsel %vm1009, %v1687, %v1688
        %v1691 = vadd.f32 %v1679, %v1689
        %s1692 = sld [smem:[#allocation8 + $0x4f]]
        %v1693 = vld [vmem:[%s297] sm:$0x7]
        %v1694 = vstv %s1692
        %v1695 = vmul.f32 %v1693, %v1694
        %v1696 = vmul.f32 %v1695, %v1021
        %1698 = vrot.lane.b32.xlu0 %v1696, 62
        %v1699 = vpop.permute.xlu0 %1698
        %v1700 = vrot.slane %v1699, 1
        %v1701 = vsel %vm1028, %v1699, %v1700
        %v1703 = vadd.f32 %v1691, %v1701
        %s1704 = sld [smem:[#allocation8 + $0x50]]
        %v1705 = vld [vmem:[%s297] sm:$0x7]
        %v1706 = vstv %s1704
        %v1707 = vmul.f32 %v1705, %v1706
        %1709 = vrot.lane.b32.xlu0 %v1707, 61
        %v1710 = vpop.permute.xlu0 %1709
        %v1711 = vrot.slane %v1710, 1
        %v1712 = vsel %vm1040, %v1710, %v1711
        %v1714 = vadd.f32 %v1703, %v1712
        %s1715 = sld [smem:[#allocation8 + $0x51]]
        %v1716 = vstv %s1715
        %v1717 = vmul.f32 %v1705, %v1716
        %v1718 = vmul.f32 %v1717, %v1051
        %1720 = vrot.lane.b32.xlu0 %v1718, 60
        %v1721 = vpop.permute.xlu0 %1720
        %v1722 = vrot.slane %v1721, 1
        %v1723 = vsel %vm1058, %v1721, %v1722
        %v1725 = vadd.f32 %v1714, %v1723
        %s1726 = sld [smem:[#allocation8 + $0x52]]
        %v1727 = vld [vmem:[%s297] sm:$0x7]
        %v1728 = vstv %s1726
        %v1729 = vmul.f32 %v1727, %v1728
        %v1730 = vmul.f32 %v1729, %v1070
        %1732 = vrot.lane.b32.xlu0 %v1730, 59
        %v1733 = vpop.permute.xlu0 %1732
        %v1734 = vrot.slane %v1733, 1
        %v1735 = vsel %vm1077, %v1733, %v1734
        %v1737 = vadd.f32 %v1725, %v1735
        %s1738 = sld [smem:[#allocation8 + $0x53]]
        %v1739 = vld [vmem:[%s297] sm:$0x7]
        %v1740 = vstv %s1738
        %v1741 = vmul.f32 %v1739, %v1740
        %v1742 = vmul.f32 %v1741, %v1089
        %1744 = vrot.lane.b32.xlu0 %v1742, 58
        %v1745 = vpop.permute.xlu0 %1744
        %v1746 = vrot.slane %v1745, 1
        %v1747 = vsel %vm1096, %v1745, %v1746
        %v1749 = vadd.f32 %v1737, %v1747
        %s1750 = sld [smem:[#allocation8 + $0x54]]
        %v1751 = vld [vmem:[%s297] sm:$0x7]
        %v1752 = vstv %s1750
        %v1753 = vmul.f32 %v1751, %v1752
        %v1754 = vmul.f32 %v1753, %v1107
        %1756 = vrot.lane.b32.xlu0 %v1754, 48
        %v1757 = vpop.permute.xlu0 %1756
        %v1758 = vrot.slane %v1757, 1
        %v1759 = vsel %vm858, %v1757, %v1758
        %v1761 = vadd.f32 %v1749, %v1759
        %s1762 = sld [smem:[#allocation8 + $0x55]]
        %v1763 = vld [vmem:[%s297] sm:$0x7]
        %v1764 = vstv %s1762
        %v1765 = vmul.f32 %v1763, %v1764
        %v1766 = vmul.f32 %v1765, %v1125
        %1768 = vrot.lane.b32.xlu0 %v1766, 47
        %v1769 = vpop.permute.xlu0 %1768
        %v1770 = vrot.slane %v1769, 1
        %v1771 = vsel %vm1132, %v1769, %v1770
        %v1773 = vadd.f32 %v1761, %v1771
        %s1774 = sld [smem:[#allocation8 + $0x56]]
        %v1775 = vld [vmem:[%s297] sm:$0x7]
        %v1776 = vstv %s1774
        %v1777 = vmul.f32 %v1775, %v1776
        %v1778 = vmul.f32 %v1777, %v1144
        %1780 = vrot.lane.b32.xlu0 %v1778, 46
        %v1781 = vpop.permute.xlu0 %1780
        %v1782 = vrot.slane %v1781, 1
        %v1783 = vsel %vm1151, %v1781, %v1782
        %v1785 = vadd.f32 %v1773, %v1783
        %s1786 = sld [smem:[#allocation8 + $0x57]]
        %v1787 = vld [vmem:[%s297] sm:$0x7]
        %v1788 = vstv %s1786
        %v1789 = vmul.f32 %v1787, %v1788
        %1791 = vrot.lane.b32.xlu0 %v1789, 45
        %v1792 = vpop.permute.xlu0 %1791
        %v1793 = vrot.slane %v1792, 1
        %v1794 = vsel %vm1163, %v1792, %v1793
        %v1796 = vadd.f32 %v1785, %v1794
        %s1797 = sld [smem:[#allocation8 + $0x58]]
        %v1798 = vstv %s1797
        %v1799 = vmul.f32 %v1787, %v1798
        %v1800 = vmul.f32 %v1799, %v1174
        %1802 = vrot.lane.b32.xlu0 %v1800, 44
        %v1803 = vpop.permute.xlu0 %1802
        %v1804 = vrot.slane %v1803, 1
        %v1805 = vsel %vm1181, %v1803, %v1804
        %v1807 = vadd.f32 %v1796, %v1805
        %s1808 = sld [smem:[#allocation8 + $0x59]]
        %v1809 = vld [vmem:[%s297] sm:$0x7]
        %v1810 = vstv %s1808
        %v1811 = vmul.f32 %v1809, %v1810
        %v1812 = vmul.f32 %v1811, %v1193
        %1814 = vrot.lane.b32.xlu0 %v1812, 43
        %v1815 = vpop.permute.xlu0 %1814
        %v1816 = vrot.slane %v1815, 1
        %v1817 = vsel %vm1200, %v1815, %v1816
        %v1819 = vadd.f32 %v1807, %v1817
        %s1820 = sld [smem:[#allocation8 + $0x5a]]
        %v1821 = vld [vmem:[%s297] sm:$0x7]
        %v1822 = vstv %s1820
        %v1823 = vmul.f32 %v1821, %v1822
        %v1824 = vmul.f32 %v1823, %v1212
        %1826 = vrot.lane.b32.xlu0 %v1824, 42
        %v1827 = vpop.permute.xlu0 %1826
        %v1828 = vrot.slane %v1827, 1
        %v1829 = vsel %vm1219, %v1827, %v1828
        %v1831 = vadd.f32 %v1819, %v1829
        %s1832 = sld [smem:[#allocation8 + $0x5b]]
        %v1833 = vld [vmem:[%s297] sm:$0x7]
        %v1834 = vstv %s1832
        %v1835 = vmul.f32 %v1833, %v1834
        %v1836 = vmul.f32 %v1835, %v1230
        %1838 = vrot.lane.b32.xlu0 %v1836, 32
        %v1839 = vpop.permute.xlu0 %1838
        %v1840 = vrot.slane %v1839, 1
        %v1841 = vsel %vm733, %v1839, %v1840
        %v1843 = vadd.f32 %v1831, %v1841
        %s1844 = sld [smem:[#allocation8 + $0x5c]]
        %v1845 = vld [vmem:[%s297] sm:$0x7]
        %v1846 = vstv %s1844
        %v1847 = vmul.f32 %v1845, %v1846
        %v1848 = vmul.f32 %v1847, %v1248
        %1850 = vrot.lane.b32.xlu0 %v1848, 31
        %v1851 = vpop.permute.xlu0 %1850
        %v1852 = vrot.slane %v1851, 1
        %v1853 = vsel %vm1255, %v1851, %v1852
        %v1855 = vadd.f32 %v1843, %v1853
        %s1856 = sld [smem:[#allocation8 + $0x5d]]
        %v1857 = vld [vmem:[%s297] sm:$0x7]
        %v1858 = vstv %s1856
        %v1859 = vmul.f32 %v1857, %v1858
        %v1860 = vmul.f32 %v1859, %v1267
        %1862 = vrot.lane.b32.xlu0 %v1860, 30
        %v1863 = vpop.permute.xlu0 %1862
        %v1864 = vrot.slane %v1863, 1
        %v1865 = vsel %vm1274, %v1863, %v1864
        %v1867 = vadd.f32 %v1855, %v1865
        %s1868 = sld [smem:[#allocation8 + $0x5e]]
        %v1869 = vld [vmem:[%s297] sm:$0x7]
        %v1870 = vstv %s1868
        %v1871 = vmul.f32 %v1869, %v1870
        %1873 = vrot.lane.b32.xlu0 %v1871, 29
        %v1874 = vpop.permute.xlu0 %1873
        %v1875 = vrot.slane %v1874, 1
        %v1876 = vsel %vm1286, %v1874, %v1875
        %v1878 = vadd.f32 %v1867, %v1876
        %s1879 = sld [smem:[#allocation8 + $0x5f]]
        %v1880 = vstv %s1879
        %v1881 = vmul.f32 %v1869, %v1880
        %v1882 = vmul.f32 %v1881, %v1297
        %1884 = vrot.lane.b32.xlu0 %v1882, 28
        %v1885 = vpop.permute.xlu0 %1884
        %v1886 = vrot.slane %v1885, 1
        %v1887 = vsel %vm1304, %v1885, %v1886
        %v1889 = vadd.f32 %v1878, %v1887
        %s1890 = sld [smem:[#allocation8 + $0x60]]
        %v1891 = vld [vmem:[%s297] sm:$0x7]
        %v1892 = vstv %s1890
        %v1893 = vmul.f32 %v1891, %v1892
        %v1894 = vmul.f32 %v1893, %v1316
        %1896 = vrot.lane.b32.xlu0 %v1894, 27
        %v1897 = vpop.permute.xlu0 %1896
        %v1898 = vrot.slane %v1897, 1
        %v1899 = vsel %vm1323, %v1897, %v1898
        %v1901 = vadd.f32 %v1889, %v1899
        %s1902 = sld [smem:[#allocation8 + $0x61]]
        %v1903 = vld [vmem:[%s297] sm:$0x7]
        %v1904 = vstv %s1902
        %v1905 = vmul.f32 %v1903, %v1904
        %v1906 = vmul.f32 %v1905, %v1335
        %1908 = vrot.lane.b32.xlu0 %v1906, 26
        %v1909 = vpop.permute.xlu0 %1908
        %v1910 = vrot.slane %v1909, 1
        %v1911 = vsel %vm1342, %v1909, %v1910
        %v1913 = vadd.f32 %v1901, %v1911
        %s1914 = sld [smem:[#allocation3]]
        %v1915 = vstv %s1914
        %v1916 = vadd.f32 %v1913, %v1915
        %v1917 = vxor.u32 %v1916, 2147483648
        %v1918 = vmul.f32 %v1917, 1.442695
        %v1919 = vpow.pop %v1918
        %v1920 = vadd.f32 %v1919, 1.0
        %v1921 = vrcp.pop %v1920
        %v1922 = vmul.f32 1.0, %v1921
        %v1923 = vld [vmem:[%s174] sm:$0xff]
        %v1925 = vlaneseq
        %v1926 = vshrl.u32 %v1925, 7
        %v1927 = vsub.s32 0, %v1926
        %v1928 = vrot.slane %v1922, %v1927
        %v1929 = vlaneseq
        %v1930 = vshrl.u32 %v1929, 7
        %v1931 = vsub.s32 1, %v1930
        %v1932 = vrot.slane %v1922, %v1931
        %v1933 = vcombine.low %v1928, %v1932
        %v1935 = vmul.f32 %v1923, %v1933
        %1936 = vst [vmem:[%s201] sm:$0xff] %v1935
        %s1937 = sand.u32 %s98, 1
        %s1938 = scalar_lea.sflag [#allocation6], %s1937
        %s1939 = sand.u32 %s98, 1
        %s1940 = smul.addr %s1939, 8
        %s1941 = scalar_lea.vmem [#allocation9], %s1940
        // Predicated region
        $region41: #{tpu_custom_call.1} parent=31 // pred_check
          %p1942 = pneg %p108
        $region42: #{tpu_custom_call.1} parent=31 // pred_check_branch
          %1944 = sbr.rel (%p1942) target = $region44
        $region43: #{tpu_custom_call.1} parent=31 // pred_region
          %s1946 = ssub.s32 128, 128
          %1947 = vsyncadd %s1938, %s1946
          %s1948 = smul.addr %s22, 2
          %s1949 = smul.addr %s1948, 64
          %s1950 = scalar_lea.hbm %s3, %s1949
          %s1952 = sshll.u32 %s1941, 4
          %s1953 = int_to_ptr.vmem [resolvable:$true] %s1952
          %1955 = dma.vmem_to_hbm [thread:$0]  %s1953, 128, %s1950, %s1938
        $region44: #{tpu_custom_call.1} parent=31 // pred_fallthru
          _
      $region32: #{tpu_custom_call.1} parent=5 // pred_fallthru
        _
      %p1956 = scmp.le.s32.totalorder 2, %s17
      // Predicated region
      $region45: #{tpu_custom_call.1} parent=5 // pred_check
        %p1957 = pneg %p1956
      $region46: #{tpu_custom_call.1} parent=5 // pred_check_branch
        %1959 = sbr.rel (%p1957) target = $region48
      $region47: #{tpu_custom_call.1} parent=5 // pred_region
        %s1960 = ssub.s32 %s17, 2
        // Predicated region
        $region49: #{tpu_custom_call.1} parent=47 // pred_check
          %p1961 = pneg %p114
        $region50: #{tpu_custom_call.1} parent=47 // pred_check_branch
          %1963 = sbr.rel (%p1961) target = $region52
        $region51: #{tpu_custom_call.1} parent=47 // pred_region
          %s1964 = sand.u32 %s99, 1
          %s1965 = scalar_lea.sflag [#allocation6], %s1964
          %s1966 = sand.u32 %s99, 1
          %s1967 = smul.addr %s1966, 8
          %s1968 = scalar_lea.vmem [#allocation9], %s1967
          %1969 = dma.done %s1965, 128
        $region52: #{tpu_custom_call.1} parent=47 // pred_fallthru
          _
      $region48: #{tpu_custom_call.1} parent=5 // pred_fallthru
        _
    $region6: #{tpu_custom_call.1} parent=1 // loop_footer
      %s21 = sadd.s32 1, %s17
    $region7: #{tpu_custom_call.1} parent=1 // loop_footer_branch
      %16 = sbr.rel target = $region3
    $region8: #{tpu_custom_call.1} parent=1 // loop_exit
      _
    %1970 = vsyncpa [#allocation5], 1
    %s1971 = scalar_lea.sflag [#allocation5], 1
    %1972 = vsyncpa %s1971, 1
    %1973 = vsyncpa [#allocation6], 1
    %s1974 = scalar_lea.sflag [#allocation6], 1
    %1975 = vsyncpa %s1974, 1
    %1976 = vsyncpa [#allocation7], 1
    %s1977 = scalar_lea.sflag [#allocation7], 1
    %1978 = vsyncpa %s1977, 1

</llo_original>
